<compile_context>
chip_gen: v5e
topology: v5e:2x2
jax: 0.10.0
libtpu: 0.0.40
codegen_flags: <defaults>
</compile_context>

<pallas_src>
import jax
import jax.numpy as jnp
from jax import lax
from jax.experimental import pallas as pl
from jax.experimental.pallas import tpu as pltpu

_SELU_ALPHA = 1.6732632423543772
_SELU_SCALE = 1.0507009873554805
_LN_EPS = 1e-6


def _selu(x):
    # clamp the exp argument so the (discarded) positive branch cannot overflow
    return _SELU_SCALE * jnp.where(
        x > 0, x, _SELU_ALPHA * (jnp.exp(jnp.minimum(x, 0.0)) - 1.0))


def _relu(x):
    return jnp.maximum(x, 0.0)


def _grouped_layernorm(t, alpha, beta, G, GT, d):
    """Per-basis LayerNorm on a (TJ, n_base*d) slab; groups of width d.

    Torch-style statistics (unbiased std, eps added AFTER sqrt). Fused form:
    only TWO serially dependent MXU matmuls (stats, broadcast) instead of four."""
    TJ = t.shape[0]
    s = jnp.dot(jnp.concatenate([t, t * t], axis=0), G,
                preferred_element_type=jnp.float32)              # (2*TJ, n_base)
    sums, sqs = s[:TJ], s[TJ:]
    mean = sums * (1.0 / d)
    # unbiased variance via sum(x^2) - (sum x)*mean, guarded against cancellation
    var = jnp.maximum(sqs - sums * mean, 0.0) * (1.0 / (d - 1))
    std = jnp.sqrt(var) + _LN_EPS
    inv = pl.reciprocal(std, approx=False)                       # exact (validation-safe)
    b = jnp.dot(jnp.concatenate([mean, inv], axis=0), GT,
                preferred_element_type=jnp.float32)              # (2*TJ, F)
    return (t - b[:TJ]) * b[TJ:] * alpha + beta


def _full_layernorm_T(s, alpha_col, beta_col, d):
    """LayerNorm over the feature axis in TRANSPOSED layout: s is (d, TB), features on sublanes."""
    mean = jnp.mean(s, axis=0, keepdims=True)                    # (1, TB)
    c = s - mean
    var = jnp.sum(c * c, axis=0, keepdims=True) * (1.0 / (d - 1))
    std = jnp.sqrt(var) + _LN_EPS
    return c * pl.reciprocal(std, approx=False) * alpha_col + beta_col


# --------------------------------- kernels ---------------------------------

def _make_basis_kernel(n_base, Hb, Lb):
    """Batch-independent: evaluate all n_base basis MLPs (SELU) on a tile of the time grid.

    The n_base identical networks are batched horizontally: per-layer weights are packed
    block-diagonally so every matmul is lane-dense (width F = n_base*Hb)."""

    def kernel(tcol_ref, w1b_ref, wbh_ref, bb_ref, ab_ref, betab_ref,
               wob_ref, bob_ref, g_ref, gt_ref, bases_ref):
        G = g_ref[...]                                           # (F, n_base) f32
        GT = gt_ref[...]                                         # (n_base, F) f32

        # first layer has in_d == 1: outer product of the time column (VPU, f32)
        t = tcol_ref[...] * w1b_ref[...] + bb_ref[0]             # (TJ, F)
        t = t + _grouped_layernorm(t, ab_ref[0], betab_ref[0], G, GT, Hb)
        t = _selu(t)
        for l in range(1, Lb):
            t = jnp.dot(t.astype(wbh_ref.dtype), wbh_ref[l - 1],
                        preferred_element_type=jnp.float32) + bb_ref[l]
            t = t + _grouped_layernorm(t, ab_ref[l], betab_ref[l], G, GT, Hb)
            t = _selu(t)
        # TODO(synk): nn.Dropout is stochastic; implemented as identity (eval mode).
        bases_ref[...] = jnp.dot(t.astype(wob_ref.dtype), wob_ref[...],
                                 preferred_element_type=jnp.float32) + bob_ref[...]

    return kernel


def _make_head_kernel(n_base, Hs, Ls):
    """Batched: trapezoid-rule score + subsequent MLP (ReLU), in TRANSPOSED (lane = batch)
    orientation so matmuls are lane-dense and the output store is an unmasked (1, TB) slab."""

    def kernel(xt_ref, wtrap_ref, bases_ref, w1sT_ref, wshT_ref,
               bsT_ref, asT_ref, betasT_ref, wosT_ref, bosT_ref, out_ref):
        # score^T[k, b] = sum_j w_j * x[b, j] * basis_k(t_j)  (quadrature weights precomputed)
        xw = xt_ref[...] * wtrap_ref[...]                        # (J, TB) f32
        scoreT = lax.dot_general(bases_ref[...], xw,
                                 (((0,), (0,)), ((), ())),
                                 preferred_element_type=jnp.float32)   # (n_base, TB)

        s = jnp.dot(w1sT_ref[...], scoreT.astype(w1sT_ref.dtype),
                    preferred_element_type=jnp.float32) + bsT_ref[0]   # (Hs, TB)
        s = s + _full_layernorm_T(s, asT_ref[0], betasT_ref[0], Hs)
        s = _relu(s)
        for l in range(1, Ls):
            s = jnp.dot(wshT_ref[l - 1], s.astype(wshT_ref.dtype),
                        preferred_element_type=jnp.float32) + bsT_ref[l]
            s = s + _full_layernorm_T(s, asT_ref[l], betasT_ref[l], Hs)
            s = _relu(s)
        # TODO(synk): dropout identity (eval mode).
        out_ref[...] = jnp.dot(wosT_ref[...], s.astype(wosT_ref.dtype),
                               preferred_element_type=jnp.float32) + bosT_ref[...]  # (1, TB)

    return kernel


# ----------------------------- parameter setup (plain JAX glue) -----------------------------

def init_feedforward_params(key, in_d, hidden):
    """Deterministic synthetic init mirroring FeedForward.__init__ shapes.

    Flat layout per hidden layer: [W (d_in, d_out), b (1, d_out),
    ln.alpha (1, d_out), ln.beta (1, d_out)], then final [W, b]."""
    dims = [in_d] + list(hidden) + [1]
    params = []
    for i in range(1, len(dims)):
        key, kw, kb, ka, kbe = jax.random.split(key, 5)
        fan_in = dims[i - 1]
        W = (jax.random.normal(kw, (dims[i - 1], dims[i]), jnp.float32)
             / jnp.sqrt(float(fan_in)))
        b = 0.1 * jax.random.normal(kb, (1, dims[i]), jnp.float32)
        params += [W, b]
        if i < len(dims) - 1:
            alpha = jax.random.normal(ka, (1, dims[i]), jnp.float32)
            beta = jax.random.normal(kbe, (1, dims[i]), jnp.float32)
            params += [alpha, beta]
    return params, key


def _pack_basis_params(basis_params, n_base, Hb, Lb, mxu_dtype):
    """Stack n_base identical-shape basis nets into lane-dense / block-diagonal arrays.
    MXU weight matrices are cast to mxu_dtype (bf16 by default); everything else stays f32."""
    F = n_base * Hb
    w1 = jnp.concatenate([p[0] for p in basis_params], axis=1)            # (1, F) f32 (VPU)
    bias = [jnp.concatenate([p[1] for p in basis_params], axis=1)]
    alpha = [jnp.concatenate([p[2] for p in basis_params], axis=1)]
    beta = [jnp.concatenate([p[3] for p in basis_params], axis=1)]
    wh = []
    for l in range(1, Lb):
        i0 = 4 * l
        Wl = jnp.zeros((F, F), jnp.float32)
        for k in range(n_base):
            Wl = Wl.at[k * Hb:(k + 1) * Hb, k * Hb:(k + 1) * Hb].set(basis_params[k][i0])
        wh.append(Wl)
        bias.append(jnp.concatenate([p[i0 + 1] for p in basis_params], axis=1))
        alpha.append(jnp.concatenate([p[i0 + 2] for p in basis_params], axis=1))
        beta.append(jnp.concatenate([p[i0 + 3] for p in basis_params], axis=1))
    i0 = 4 * Lb
    wo = jnp.zeros((F, n_base), jnp.float32)
    for k in range(n_base):
        wo = wo.at[k * Hb:(k + 1) * Hb, k:k + 1].set(basis_params[k][i0])
    bo = jnp.concatenate([p[i0 + 1] for p in basis_params], axis=1)        # (1, n_base)
    wh = (jnp.stack(wh, axis=0).astype(mxu_dtype) if wh
          else jnp.zeros((1, F, F), mxu_dtype))
    return (w1, wh, jnp.stack(bias, 0), jnp.stack(alpha, 0), jnp.stack(beta, 0),
            wo.astype(mxu_dtype), bo)


def _pack_ff_params_T(ff_params, Hs, Ls, mxu_dtype):
    """Subsequent-net params, pre-transposed for the lane=batch orientation."""
    w1T = ff_params[0].T.astype(mxu_dtype)                                 # (Hs, n_base)
    bias = [ff_params[1].T]                                                # (Hs, 1)
    alpha = [ff_params[2].T]
    beta = [ff_params[3].T]
    whT = []
    for l in range(1, Ls):
        i0 = 4 * l
        whT.append(ff_params[i0].T)
        bias.append(ff_params[i0 + 1].T)
        alpha.append(ff_params[i0 + 2].T)
        beta.append(ff_params[i0 + 3].T)
    woT = ff_params[4 * Ls].T.astype(mxu_dtype)                            # (1, Hs)
    boT = ff_params[4 * Ls + 1].T                                          # (1, 1)
    whT = (jnp.stack(whT, axis=0).astype(mxu_dtype) if whT
           else jnp.zeros((1, Hs, Hs), mxu_dtype))
    return (w1T, whT, jnp.stack(bias, 0), jnp.stack(alpha, 0), jnp.stack(beta, 0), woT, boT)


def adafnn_forward(x, t, h, basis_params, ff_params, base_hidden, sub_hidden,
                   mxu_dtype=jnp.bfloat16):
    B, J = x.shape
    assert J == h.shape[0] + 1
    n_base = len(basis_params)
    assert len(set(base_hidden)) == 1 and len(set(sub_hidden)) == 1, \
        "fused kernels assume uniform hidden widths per network"
    Hb, Lb = base_hidden[0], len(base_hidden)
    Hs, Ls = sub_hidden[0], len(sub_hidden)
    F = n_base * Hb
    wbytes = jnp.dtype(mxu_dtype).itemsize

    tcol = t.reshape(J, 1).astype(jnp.float32)
    # trapezoid quadrature weights: w_0 = h_0/2, w_j = (h_{j-1}+h_j)/2, w_{J-1} = h_{J-2}/2
    h = h.astype(jnp.float32)
    zero = jnp.zeros((1,), jnp.float32)
    wtrap_col = (0.5 * (jnp.concatenate([zero, h]) + jnp.concatenate([h, zero]))).reshape(J, 1)

    w1b, wbh, bb, ab, betab, wob, bob = _pack_basis_params(
        basis_params, n_base, Hb, Lb, mxu_dtype)
    w1sT, wshT, bsT, asT, betasT, wosT, bosT = _pack_ff_params_T(
        ff_params, Hs, Ls, mxu_dtype)

    # group-indicator matrices for per-basis LayerNorm reductions on the fused slab (f32)
    gidx = jnp.arange(F) // Hb
    G = (gidx[:, None] == jnp.arange(n_base)[None, :]).astype(jnp.float32)   # (F, n_base)
    GT = G.T                                                                 # (n_base, F)

    # TODO(synk): l2_norm / normalized_bases (consumed only by the R1/R2 regularizers,
    # never by forward's output) are not materialized in this forward.

    # replicated (grid-invariant) parameter spec; tiny weights, constant block index.
    def rep(a):
        nd = a.ndim
        return pl.BlockSpec(a.shape, lambda i, _nd=nd: (0,) * _nd)

    # ---------------- stage 1: batch-independent basis networks (hoisted) ----------------
    TJ = J
    if J > 512:
        for cand in (512, 256, 128, 64, 32, 16, 8):
            if J % cand == 0:
                TJ = cand
                break
    basis_args = (w1b, wbh, bb, ab, betab, wob, bob, G, GT)
    basis_flops = int(2 * J * F + (Lb - 1) * 2 * J * F * F
                      + Lb * 2 * (2 * (2 * J) * F * n_base)
                      + Lb * 8 * J * F + 2 * J * F * n_base)
    basis_trans = int(Lb * J * F + 2 * Lb * J * n_base)
    basis_bytes = int(J * 8 + F * 4 + (Lb - 1) * F * F * wbytes + Lb * 3 * F * 4
                      + F * n_base * wbytes + 2 * F * n_base * 4 + J * n_base * 4)

    bases = pl.pallas_call(
        _make_basis_kernel(n_base, Hb, Lb),
        out_shape=jax.ShapeDtypeStruct((J, n_base), jnp.float32),
        grid=(J // TJ,),
        in_specs=[pl.BlockSpec((TJ, 1), lambda i: (i, 0))] + [rep(a) for a in basis_args],
        out_specs=pl.BlockSpec((TJ, n_base), lambda i: (i, 0)),
        compiler_params=pltpu.CompilerParams(
            dimension_semantics=("parallel",), vmem_limit_bytes=32 * 1024 * 1024),
        cost_estimate=pl.CostEstimate(flops=basis_flops, transcendentals=basis_trans,
                                      bytes_accessed=basis_bytes),
    )(tcol, *basis_args)

    # ---------------- stage 2: batched trapezoid score + subsequent MLP ----------------
    # lane = batch orientation; TB is full B or a multiple of 128 (lane-dense x / output blocks).
    TB = B if B <= 128 else 128
    assert B % TB == 0, "batch must be a multiple of the batch tile (128 for large B)"
    xT = x.astype(jnp.float32).T                                            # (J, B)

    head_args = (wtrap_col, bases, w1sT, wshT, bsT, asT, betasT, wosT, bosT)
    head_flops = int(B * J + 2 * B * J * n_base + 2 * B * n_base * Hs
                     + (Ls - 1) * 2 * B * Hs * Hs + Ls * 8 * B * Hs + 2 * B * Hs)
    head_trans = int(2 * Ls * B)
    head_bytes = int(B * J * 4 + J * 4 + J * n_base * 4 + Hs * n_base * wbytes
                     + (Ls - 1) * Hs * Hs * wbytes + Ls * 3 * Hs * 4 + Hs * wbytes + 4 + B * 4)

    outT = pl.pallas_call(
        _make_head_kernel(n_base, Hs, Ls),
        out_shape=jax.ShapeDtypeStruct((1, B), jnp.float32),
        grid=(B // TB,),
        in_specs=[pl.BlockSpec((J, TB), lambda i: (0, i))] + [rep(a) for a in head_args],
        out_specs=pl.BlockSpec((1, TB), lambda i: (0, i)),
        compiler_params=pltpu.CompilerParams(
            dimension_semantics=("parallel",), vmem_limit_bytes=32 * 1024 * 1024),
        cost_estimate=pl.CostEstimate(flops=head_flops, transcendentals=head_trans,
                                      bytes_accessed=head_bytes),
    )(xT, *head_args)

    return outT.reshape(B, 1)


if __name__ == "__main__":
    B, J = 8, 16
    n_base = 4
    base_hidden = [64, 64, 64]     # module defaults -> fused basis slab F = 4*64 = 256 lanes
    sub_hidden = [128, 128, 128]   # module defaults -> Hs = 128

    key = jax.random.PRNGKey(0)
    grid_pts = jnp.linspace(0.0, 1.0, J).astype(jnp.float32)
    t = grid_pts                                              # (J,)
    h = (grid_pts[1:] - grid_pts[:-1]).astype(jnp.float32)    # (J-1,)

    basis_params = []
    for _ in range(n_base):
        p, key = init_feedforward_params(key, 1, base_hidden)
        basis_params.append(p)
    ff_params, key = init_feedforward_params(key, n_base, sub_hidden)

    key, kx = jax.random.split(key)
    x = jax.random.normal(kx, (B, J), jnp.float32)

    out = adafnn_forward(x, t, h, basis_params, ff_params, base_hidden, sub_hidden)
    out = jax.block_until_ready(out)
    assert out.shape == (B, 1) and out.dtype == jnp.float32
    print("KERNEL_OK")
</pallas_src>

<mosaic_0001>
module attributes {stable_mosaic.version = 11 : i64} {
  func.func @kernel(%arg0: i32, %arg1: memref<16x1xf32, #tpu.memory_space<vmem>>, %arg2: memref<1x256xf32, #tpu.memory_space<vmem>>, %arg3: memref<2x256x256xbf16, #tpu.memory_space<vmem>>, %arg4: memref<3x1x256xf32, #tpu.memory_space<vmem>>, %arg5: memref<3x1x256xf32, #tpu.memory_space<vmem>>, %arg6: memref<3x1x256xf32, #tpu.memory_space<vmem>>, %arg7: memref<256x4xbf16, #tpu.memory_space<vmem>>, %arg8: memref<1x4xf32, #tpu.memory_space<vmem>>, %arg9: memref<256x4xf32, #tpu.memory_space<vmem>>, %arg10: memref<4x256xf32, #tpu.memory_space<vmem>>, %arg11: memref<16x4xf32, #tpu.memory_space<vmem>>) attributes {dimension_semantics = [#tpu.dimension_semantics<parallel>], iteration_bounds = array<i64: 1>, scalar_prefetch = 0 : i64, scratch_operands = 0 : i64, tpu.core_type = #tpu.core_type<tc>, window_params = [{transform_indices = @transform_0, window_bounds = array<i64: 16, 1>}, {pipeline_mode = #tpu.pipeline_mode<synchronous>, transform_indices = @transform_1, window_bounds = array<i64: 1, 256>}, {pipeline_mode = #tpu.pipeline_mode<synchronous>, transform_indices = @transform_2, window_bounds = array<i64: 2, 256, 256>}, {pipeline_mode = #tpu.pipeline_mode<synchronous>, transform_indices = @transform_3, window_bounds = array<i64: 3, 1, 256>}, {pipeline_mode = #tpu.pipeline_mode<synchronous>, transform_indices = @transform_4, window_bounds = array<i64: 3, 1, 256>}, {pipeline_mode = #tpu.pipeline_mode<synchronous>, transform_indices = @transform_5, window_bounds = array<i64: 3, 1, 256>}, {pipeline_mode = #tpu.pipeline_mode<synchronous>, transform_indices = @transform_6, window_bounds = array<i64: 256, 4>}, {pipeline_mode = #tpu.pipeline_mode<synchronous>, transform_indices = @transform_7, window_bounds = array<i64: 1, 4>}, {pipeline_mode = #tpu.pipeline_mode<synchronous>, transform_indices = @transform_8, window_bounds = array<i64: 256, 4>}, {pipeline_mode = #tpu.pipeline_mode<synchronous>, transform_indices = @transform_9, window_bounds = array<i64: 4, 256>}, {transform_indices = @transform_10, window_bounds = array<i64: 16, 4>}]} {
    %c0 = arith.constant 0 : index
    %c0_0 = arith.constant 0 : index
    %0 = vector.load %arg9[%c0, %c0_0] : memref<256x4xf32, #tpu.memory_space<vmem>>, vector<256x4xf32>
    %c0_1 = arith.constant 0 : index
    %c0_2 = arith.constant 0 : index
    %1 = vector.load %arg10[%c0_1, %c0_2] : memref<4x256xf32, #tpu.memory_space<vmem>>, vector<4x256xf32>
    %c0_3 = arith.constant 0 : index
    %c0_4 = arith.constant 0 : index
    %2 = vector.load %arg1[%c0_3, %c0_4] : memref<16x1xf32, #tpu.memory_space<vmem>>, vector<16x1xf32>
    %c0_5 = arith.constant 0 : index
    %c0_6 = arith.constant 0 : index
    %3 = vector.load %arg2[%c0_5, %c0_6] : memref<1x256xf32, #tpu.memory_space<vmem>>, vector<1x256xf32>
    %4 = vector.broadcast %2 : vector<16x1xf32> to vector<16x256xf32>
    %5 = vector.broadcast %3 : vector<1x256xf32> to vector<16x256xf32>
    %6 = arith.mulf %4, %5 : vector<16x256xf32>
    %c0_7 = arith.constant 0 : index
    %c0_8 = arith.constant 0 : index
    %c0_9 = arith.constant 0 : index
    %7 = vector.load %arg4[%c0_7, %c0_8, %c0_9] : memref<3x1x256xf32, #tpu.memory_space<vmem>>, vector<1x1x256xf32>
    %8 = vector.shape_cast %7 : vector<1x1x256xf32> to vector<1x256xf32>
    %9 = vector.broadcast %8 : vector<1x256xf32> to vector<16x256xf32>
    %10 = arith.addf %6, %9 : vector<16x256xf32>
    %c0_10 = arith.constant 0 : index
    %c0_11 = arith.constant 0 : index
    %c0_12 = arith.constant 0 : index
    %11 = vector.load %arg5[%c0_10, %c0_11, %c0_12] : memref<3x1x256xf32, #tpu.memory_space<vmem>>, vector<1x1x256xf32>
    %12 = vector.shape_cast %11 : vector<1x1x256xf32> to vector<1x256xf32>
    %c0_13 = arith.constant 0 : index
    %c0_14 = arith.constant 0 : index
    %c0_15 = arith.constant 0 : index
    %13 = vector.load %arg6[%c0_13, %c0_14, %c0_15] : memref<3x1x256xf32, #tpu.memory_space<vmem>>, vector<1x1x256xf32>
    %14 = vector.shape_cast %13 : vector<1x1x256xf32> to vector<1x256xf32>
    %15 = arith.mulf %10, %10 : vector<16x256xf32>
    %16 = tpu.concatenate %10, %15 in 0 : vector<16x256xf32>, vector<16x256xf32> -> vector<32x256xf32>
    %cst = arith.constant dense<0.000000e+00> : vector<32x4xf32>
    %17 = tpu.matmul %16, %0, %cst {dimension_numbers = #tpu.dot_dimension_numbers<[1], [0], [0], [1], [0, 0, 1, 1], [], []>} : vector<32x256xf32>, vector<256x4xf32>, vector<32x4xf32> -> vector<32x4xf32>
    %18 = vector.extract_strided_slice %17 {offsets = [0, 0], sizes = [16, 4], strides = [1, 1]} : vector<32x4xf32> to vector<16x4xf32>
    %19 = vector.extract_strided_slice %17 {offsets = [16, 0], sizes = [16, 4], strides = [1, 1]} : vector<32x4xf32> to vector<16x4xf32>
    %cst_16 = arith.constant 1.562500e-02 : f32
    %20 = vector.broadcast %cst_16 : f32 to vector<16x4xf32>
    %21 = arith.mulf %18, %20 : vector<16x4xf32>
    %22 = arith.mulf %18, %21 : vector<16x4xf32>
    %23 = arith.subf %19, %22 : vector<16x4xf32>
    %cst_17 = arith.constant 0.000000e+00 : f32
    %24 = vector.broadcast %cst_17 : f32 to vector<16x4xf32>
    %25 = arith.maximumf %23, %24 : vector<16x4xf32>
    %cst_18 = arith.constant 0.0158730168 : f32
    %26 = vector.broadcast %cst_18 : f32 to vector<16x4xf32>
    %27 = arith.mulf %25, %26 : vector<16x4xf32>
    %28 = math.sqrt %27 : vector<16x4xf32>
    %cst_19 = arith.constant 9.99999997E-7 : f32
    %29 = vector.broadcast %cst_19 : f32 to vector<16x4xf32>
    %30 = arith.addf %28, %29 : vector<16x4xf32>
    %31 = tpu.reciprocal %30 : vector<16x4xf32> -> vector<16x4xf32>
    %32 = tpu.concatenate %21, %31 in 0 : vector<16x4xf32>, vector<16x4xf32> -> vector<32x4xf32>
    %cst_20 = arith.constant dense<0.000000e+00> : vector<32x256xf32>
    %33 = tpu.matmul %32, %1, %cst_20 {dimension_numbers = #tpu.dot_dimension_numbers<[1], [0], [0], [1], [0, 0, 1, 1], [], []>} : vector<32x4xf32>, vector<4x256xf32>, vector<32x256xf32> -> vector<32x256xf32>
    %34 = vector.extract_strided_slice %33 {offsets = [0, 0], sizes = [16, 256], strides = [1, 1]} : vector<32x256xf32> to vector<16x256xf32>
    %35 = arith.subf %10, %34 : vector<16x256xf32>
    %36 = vector.extract_strided_slice %33 {offsets = [16, 0], sizes = [16, 256], strides = [1, 1]} : vector<32x256xf32> to vector<16x256xf32>
    %37 = arith.mulf %35, %36 : vector<16x256xf32>
    %38 = vector.broadcast %12 : vector<1x256xf32> to vector<16x256xf32>
    %39 = arith.mulf %37, %38 : vector<16x256xf32>
    %40 = vector.broadcast %14 : vector<1x256xf32> to vector<16x256xf32>
    %41 = arith.addf %39, %40 : vector<16x256xf32>
    %42 = arith.addf %10, %41 : vector<16x256xf32>
    %cst_21 = arith.constant 0.000000e+00 : f32
    %43 = vector.broadcast %cst_21 : f32 to vector<16x256xf32>
    %44 = arith.cmpf ogt, %42, %43 : vector<16x256xf32>
    %cst_22 = arith.constant 0.000000e+00 : f32
    %45 = vector.broadcast %cst_22 : f32 to vector<16x256xf32>
    %46 = arith.minimumf %42, %45 : vector<16x256xf32>
    %47 = math.exp %46 : vector<16x256xf32>
    %cst_23 = arith.constant 1.000000e+00 : f32
    %48 = vector.broadcast %cst_23 : f32 to vector<16x256xf32>
    %49 = arith.subf %47, %48 : vector<16x256xf32>
    %cst_24 = arith.constant 1.67326319 : f32
    %50 = vector.broadcast %cst_24 : f32 to vector<16x256xf32>
    %51 = arith.mulf %50, %49 : vector<16x256xf32>
    %52 = arith.select %44, %42, %51 : vector<16x256xi1>, vector<16x256xf32>
    %cst_25 = arith.constant 1.05070102 : f32
    %53 = vector.broadcast %cst_25 : f32 to vector<16x256xf32>
    %54 = arith.mulf %53, %52 : vector<16x256xf32>
    %55 = arith.truncf %54 : vector<16x256xf32> to vector<16x256xbf16>
    %c0_26 = arith.constant 0 : index
    %c0_27 = arith.constant 0 : index
    %c0_28 = arith.constant 0 : index
    %56 = vector.load %arg3[%c0_26, %c0_27, %c0_28] : memref<2x256x256xbf16, #tpu.memory_space<vmem>>, vector<1x256x256xbf16>
    %57 = vector.shape_cast %56 : vector<1x256x256xbf16> to vector<256x256xbf16>
    %cst_29 = arith.constant dense<0.000000e+00> : vector<16x256xf32>
    %58 = tpu.matmul %55, %57, %cst_29 {dimension_numbers = #tpu.dot_dimension_numbers<[1], [0], [0], [1], [0, 0, 1, 1], [], []>} : vector<16x256xbf16>, vector<256x256xbf16>, vector<16x256xf32> -> vector<16x256xf32>
    %c1 = arith.constant 1 : index
    %c0_30 = arith.constant 0 : index
    %c0_31 = arith.constant 0 : index
    %59 = vector.load %arg4[%c1, %c0_30, %c0_31] : memref<3x1x256xf32, #tpu.memory_space<vmem>>, vector<1x1x256xf32>
    %60 = vector.shape_cast %59 : vector<1x1x256xf32> to vector<1x256xf32>
    %61 = vector.broadcast %60 : vector<1x256xf32> to vector<16x256xf32>
    %62 = arith.addf %58, %61 : vector<16x256xf32>
    %c1_32 = arith.constant 1 : index
    %c0_33 = arith.constant 0 : index
    %c0_34 = arith.constant 0 : index
    %63 = vector.load %arg5[%c1_32, %c0_33, %c0_34] : memref<3x1x256xf32, #tpu.memory_space<vmem>>, vector<1x1x256xf32>
    %64 = vector.shape_cast %63 : vector<1x1x256xf32> to vector<1x256xf32>
    %c1_35 = arith.constant 1 : index
    %c0_36 = arith.constant 0 : index
    %c0_37 = arith.constant 0 : index
    %65 = vector.load %arg6[%c1_35, %c0_36, %c0_37] : memref<3x1x256xf32, #tpu.memory_space<vmem>>, vector<1x1x256xf32>
    %66 = vector.shape_cast %65 : vector<1x1x256xf32> to vector<1x256xf32>
    %67 = arith.mulf %62, %62 : vector<16x256xf32>
    %68 = tpu.concatenate %62, %67 in 0 : vector<16x256xf32>, vector<16x256xf32> -> vector<32x256xf32>
    %cst_38 = arith.constant dense<0.000000e+00> : vector<32x4xf32>
    %69 = tpu.matmul %68, %0, %cst_38 {dimension_numbers = #tpu.dot_dimension_numbers<[1], [0], [0], [1], [0, 0, 1, 1], [], []>} : vector<32x256xf32>, vector<256x4xf32>, vector<32x4xf32> -> vector<32x4xf32>
    %70 = vector.extract_strided_slice %69 {offsets = [0, 0], sizes = [16, 4], strides = [1, 1]} : vector<32x4xf32> to vector<16x4xf32>
    %71 = vector.extract_strided_slice %69 {offsets = [16, 0], sizes = [16, 4], strides = [1, 1]} : vector<32x4xf32> to vector<16x4xf32>
    %cst_39 = arith.constant 1.562500e-02 : f32
    %72 = vector.broadcast %cst_39 : f32 to vector<16x4xf32>
    %73 = arith.mulf %70, %72 : vector<16x4xf32>
    %74 = arith.mulf %70, %73 : vector<16x4xf32>
    %75 = arith.subf %71, %74 : vector<16x4xf32>
    %cst_40 = arith.constant 0.000000e+00 : f32
    %76 = vector.broadcast %cst_40 : f32 to vector<16x4xf32>
    %77 = arith.maximumf %75, %76 : vector<16x4xf32>
    %cst_41 = arith.constant 0.0158730168 : f32
    %78 = vector.broadcast %cst_41 : f32 to vector<16x4xf32>
    %79 = arith.mulf %77, %78 : vector<16x4xf32>
    %80 = math.sqrt %79 : vector<16x4xf32>
    %cst_42 = arith.constant 9.99999997E-7 : f32
    %81 = vector.broadcast %cst_42 : f32 to vector<16x4xf32>
    %82 = arith.addf %80, %81 : vector<16x4xf32>
    %83 = tpu.reciprocal %82 : vector<16x4xf32> -> vector<16x4xf32>
    %84 = tpu.concatenate %73, %83 in 0 : vector<16x4xf32>, vector<16x4xf32> -> vector<32x4xf32>
    %cst_43 = arith.constant dense<0.000000e+00> : vector<32x256xf32>
    %85 = tpu.matmul %84, %1, %cst_43 {dimension_numbers = #tpu.dot_dimension_numbers<[1], [0], [0], [1], [0, 0, 1, 1], [], []>} : vector<32x4xf32>, vector<4x256xf32>, vector<32x256xf32> -> vector<32x256xf32>
    %86 = vector.extract_strided_slice %85 {offsets = [0, 0], sizes = [16, 256], strides = [1, 1]} : vector<32x256xf32> to vector<16x256xf32>
    %87 = arith.subf %62, %86 : vector<16x256xf32>
    %88 = vector.extract_strided_slice %85 {offsets = [16, 0], sizes = [16, 256], strides = [1, 1]} : vector<32x256xf32> to vector<16x256xf32>
    %89 = arith.mulf %87, %88 : vector<16x256xf32>
    %90 = vector.broadcast %64 : vector<1x256xf32> to vector<16x256xf32>
    %91 = arith.mulf %89, %90 : vector<16x256xf32>
    %92 = vector.broadcast %66 : vector<1x256xf32> to vector<16x256xf32>
    %93 = arith.addf %91, %92 : vector<16x256xf32>
    %94 = arith.addf %62, %93 : vector<16x256xf32>
    %cst_44 = arith.constant 0.000000e+00 : f32
    %95 = vector.broadcast %cst_44 : f32 to vector<16x256xf32>
    %96 = arith.cmpf ogt, %94, %95 : vector<16x256xf32>
    %cst_45 = arith.constant 0.000000e+00 : f32
    %97 = vector.broadcast %cst_45 : f32 to vector<16x256xf32>
    %98 = arith.minimumf %94, %97 : vector<16x256xf32>
    %99 = math.exp %98 : vector<16x256xf32>
    %cst_46 = arith.constant 1.000000e+00 : f32
    %100 = vector.broadcast %cst_46 : f32 to vector<16x256xf32>
    %101 = arith.subf %99, %100 : vector<16x256xf32>
    %cst_47 = arith.constant 1.67326319 : f32
    %102 = vector.broadcast %cst_47 : f32 to vector<16x256xf32>
    %103 = arith.mulf %102, %101 : vector<16x256xf32>
    %104 = arith.select %96, %94, %103 : vector<16x256xi1>, vector<16x256xf32>
    %cst_48 = arith.constant 1.05070102 : f32
    %105 = vector.broadcast %cst_48 : f32 to vector<16x256xf32>
    %106 = arith.mulf %105, %104 : vector<16x256xf32>
    %107 = arith.truncf %106 : vector<16x256xf32> to vector<16x256xbf16>
    %c1_49 = arith.constant 1 : index
    %c0_50 = arith.constant 0 : index
    %c0_51 = arith.constant 0 : index
    %108 = vector.load %arg3[%c1_49, %c0_50, %c0_51] : memref<2x256x256xbf16, #tpu.memory_space<vmem>>, vector<1x256x256xbf16>
    %109 = vector.shape_cast %108 : vector<1x256x256xbf16> to vector<256x256xbf16>
    %cst_52 = arith.constant dense<0.000000e+00> : vector<16x256xf32>
    %110 = tpu.matmul %107, %109, %cst_52 {dimension_numbers = #tpu.dot_dimension_numbers<[1], [0], [0], [1], [0, 0, 1, 1], [], []>} : vector<16x256xbf16>, vector<256x256xbf16>, vector<16x256xf32> -> vector<16x256xf32>
    %c2 = arith.constant 2 : index
    %c0_53 = arith.constant 0 : index
    %c0_54 = arith.constant 0 : index
    %111 = vector.load %arg4[%c2, %c0_53, %c0_54] : memref<3x1x256xf32, #tpu.memory_space<vmem>>, vector<1x1x256xf32>
    %112 = vector.shape_cast %111 : vector<1x1x256xf32> to vector<1x256xf32>
    %113 = vector.broadcast %112 : vector<1x256xf32> to vector<16x256xf32>
    %114 = arith.addf %110, %113 : vector<16x256xf32>
    %c2_55 = arith.constant 2 : index
    %c0_56 = arith.constant 0 : index
    %c0_57 = arith.constant 0 : index
    %115 = vector.load %arg5[%c2_55, %c0_56, %c0_57] : memref<3x1x256xf32, #tpu.memory_space<vmem>>, vector<1x1x256xf32>
    %116 = vector.shape_cast %115 : vector<1x1x256xf32> to vector<1x256xf32>
    %c2_58 = arith.constant 2 : index
    %c0_59 = arith.constant 0 : index
    %c0_60 = arith.constant 0 : index
    %117 = vector.load %arg6[%c2_58, %c0_59, %c0_60] : memref<3x1x256xf32, #tpu.memory_space<vmem>>, vector<1x1x256xf32>
    %118 = vector.shape_cast %117 : vector<1x1x256xf32> to vector<1x256xf32>
    %119 = arith.mulf %114, %114 : vector<16x256xf32>
    %120 = tpu.concatenate %114, %119 in 0 : vector<16x256xf32>, vector<16x256xf32> -> vector<32x256xf32>
    %cst_61 = arith.constant dense<0.000000e+00> : vector<32x4xf32>
    %121 = tpu.matmul %120, %0, %cst_61 {dimension_numbers = #tpu.dot_dimension_numbers<[1], [0], [0], [1], [0, 0, 1, 1], [], []>} : vector<32x256xf32>, vector<256x4xf32>, vector<32x4xf32> -> vector<32x4xf32>
    %122 = vector.extract_strided_slice %121 {offsets = [0, 0], sizes = [16, 4], strides = [1, 1]} : vector<32x4xf32> to vector<16x4xf32>
    %123 = vector.extract_strided_slice %121 {offsets = [16, 0], sizes = [16, 4], strides = [1, 1]} : vector<32x4xf32> to vector<16x4xf32>
    %cst_62 = arith.constant 1.562500e-02 : f32
    %124 = vector.broadcast %cst_62 : f32 to vector<16x4xf32>
    %125 = arith.mulf %122, %124 : vector<16x4xf32>
    %126 = arith.mulf %122, %125 : vector<16x4xf32>
    %127 = arith.subf %123, %126 : vector<16x4xf32>
    %cst_63 = arith.constant 0.000000e+00 : f32
    %128 = vector.broadcast %cst_63 : f32 to vector<16x4xf32>
    %129 = arith.maximumf %127, %128 : vector<16x4xf32>
    %cst_64 = arith.constant 0.0158730168 : f32
    %130 = vector.broadcast %cst_64 : f32 to vector<16x4xf32>
    %131 = arith.mulf %129, %130 : vector<16x4xf32>
    %132 = math.sqrt %131 : vector<16x4xf32>
    %cst_65 = arith.constant 9.99999997E-7 : f32
    %133 = vector.broadcast %cst_65 : f32 to vector<16x4xf32>
    %134 = arith.addf %132, %133 : vector<16x4xf32>
    %135 = tpu.reciprocal %134 : vector<16x4xf32> -> vector<16x4xf32>
    %136 = tpu.concatenate %125, %135 in 0 : vector<16x4xf32>, vector<16x4xf32> -> vector<32x4xf32>
    %cst_66 = arith.constant dense<0.000000e+00> : vector<32x256xf32>
    %137 = tpu.matmul %136, %1, %cst_66 {dimension_numbers = #tpu.dot_dimension_numbers<[1], [0], [0], [1], [0, 0, 1, 1], [], []>} : vector<32x4xf32>, vector<4x256xf32>, vector<32x256xf32> -> vector<32x256xf32>
    %138 = vector.extract_strided_slice %137 {offsets = [0, 0], sizes = [16, 256], strides = [1, 1]} : vector<32x256xf32> to vector<16x256xf32>
    %139 = arith.subf %114, %138 : vector<16x256xf32>
    %140 = vector.extract_strided_slice %137 {offsets = [16, 0], sizes = [16, 256], strides = [1, 1]} : vector<32x256xf32> to vector<16x256xf32>
    %141 = arith.mulf %139, %140 : vector<16x256xf32>
    %142 = vector.broadcast %116 : vector<1x256xf32> to vector<16x256xf32>
    %143 = arith.mulf %141, %142 : vector<16x256xf32>
    %144 = vector.broadcast %118 : vector<1x256xf32> to vector<16x256xf32>
    %145 = arith.addf %143, %144 : vector<16x256xf32>
    %146 = arith.addf %114, %145 : vector<16x256xf32>
    %cst_67 = arith.constant 0.000000e+00 : f32
    %147 = vector.broadcast %cst_67 : f32 to vector<16x256xf32>
    %148 = arith.cmpf ogt, %146, %147 : vector<16x256xf32>
    %cst_68 = arith.constant 0.000000e+00 : f32
    %149 = vector.broadcast %cst_68 : f32 to vector<16x256xf32>
    %150 = arith.minimumf %146, %149 : vector<16x256xf32>
    %151 = math.exp %150 : vector<16x256xf32>
    %cst_69 = arith.constant 1.000000e+00 : f32
    %152 = vector.broadcast %cst_69 : f32 to vector<16x256xf32>
    %153 = arith.subf %151, %152 : vector<16x256xf32>
    %cst_70 = arith.constant 1.67326319 : f32
    %154 = vector.broadcast %cst_70 : f32 to vector<16x256xf32>
    %155 = arith.mulf %154, %153 : vector<16x256xf32>
    %156 = arith.select %148, %146, %155 : vector<16x256xi1>, vector<16x256xf32>
    %cst_71 = arith.constant 1.05070102 : f32
    %157 = vector.broadcast %cst_71 : f32 to vector<16x256xf32>
    %158 = arith.mulf %157, %156 : vector<16x256xf32>
    %159 = arith.truncf %158 : vector<16x256xf32> to vector<16x256xbf16>
    %c0_72 = arith.constant 0 : index
    %c0_73 = arith.constant 0 : index
    %160 = vector.load %arg7[%c0_72, %c0_73] : memref<256x4xbf16, #tpu.memory_space<vmem>>, vector<256x4xbf16>
    %cst_74 = arith.constant dense<0.000000e+00> : vector<16x4xf32>
    %161 = tpu.matmul %159, %160, %cst_74 {dimension_numbers = #tpu.dot_dimension_numbers<[1], [0], [0], [1], [0, 0, 1, 1], [], []>} : vector<16x256xbf16>, vector<256x4xbf16>, vector<16x4xf32> -> vector<16x4xf32>
    %c0_75 = arith.constant 0 : index
    %c0_76 = arith.constant 0 : index
    %162 = vector.load %arg8[%c0_75, %c0_76] : memref<1x4xf32, #tpu.memory_space<vmem>>, vector<1x4xf32>
    %163 = vector.broadcast %162 : vector<1x4xf32> to vector<16x4xf32>
    %164 = arith.addf %161, %163 : vector<16x4xf32>
    %c0_77 = arith.constant 0 : index
    %c0_78 = arith.constant 0 : index
    %165 = vector.load %arg11[%c0_77, %c0_78] : memref<16x4xf32, #tpu.memory_space<vmem>>, vector<16x4xf32>
    tpu.vector_store %arg11[%c0_77, %c0_78], %164 {strides = array<i32>} : memref<16x4xf32, #tpu.memory_space<vmem>>, vector<16x4xf32>,
    return
  }
  func.func @transform_0(%arg0: i32) -> (i32, i32) {
    %c0_i32 = arith.constant 0 : i32
    %c0_i32_0 = arith.constant 0 : i32
    return %arg0, %c0_i32 : i32, i32
  }
  func.func @transform_1(%arg0: i32) -> (i32, i32) {
    %c0_i32 = arith.constant 0 : i32
    %c0_i32_0 = arith.constant 0 : i32
    %c0_i32_1 = arith.constant 0 : i32
    return %c0_i32, %c0_i32_0 : i32, i32
  }
  func.func @transform_2(%arg0: i32) -> (i32, i32, i32) {
    %c0_i32 = arith.constant 0 : i32
    %c0_i32_0 = arith.constant 0 : i32
    %c0_i32_1 = arith.constant 0 : i32
    %c0_i32_2 = arith.constant 0 : i32
    return %c0_i32, %c0_i32_0, %c0_i32_1 : i32, i32, i32
  }
  func.func @transform_3(%arg0: i32) -> (i32, i32, i32) {
    %c0_i32 = arith.constant 0 : i32
    %c0_i32_0 = arith.constant 0 : i32
    %c0_i32_1 = arith.constant 0 : i32
    %c0_i32_2 = arith.constant 0 : i32
    return %c0_i32, %c0_i32_0, %c0_i32_1 : i32, i32, i32
  }
  func.func @transform_4(%arg0: i32) -> (i32, i32, i32) {
    %c0_i32 = arith.constant 0 : i32
    %c0_i32_0 = arith.constant 0 : i32
    %c0_i32_1 = arith.constant 0 : i32
    %c0_i32_2 = arith.constant 0 : i32
    return %c0_i32, %c0_i32_0, %c0_i32_1 : i32, i32, i32
  }
  func.func @transform_5(%arg0: i32) -> (i32, i32, i32) {
    %c0_i32 = arith.constant 0 : i32
    %c0_i32_0 = arith.constant 0 : i32
    %c0_i32_1 = arith.constant 0 : i32
    %c0_i32_2 = arith.constant 0 : i32
    return %c0_i32, %c0_i32_0, %c0_i32_1 : i32, i32, i32
  }
  func.func @transform_6(%arg0: i32) -> (i32, i32) {
    %c0_i32 = arith.constant 0 : i32
    %c0_i32_0 = arith.constant 0 : i32
    %c0_i32_1 = arith.constant 0 : i32
    return %c0_i32, %c0_i32_0 : i32, i32
  }
  func.func @transform_7(%arg0: i32) -> (i32, i32) {
    %c0_i32 = arith.constant 0 : i32
    %c0_i32_0 = arith.constant 0 : i32
    %c0_i32_1 = arith.constant 0 : i32
    return %c0_i32, %c0_i32_0 : i32, i32
  }
  func.func @transform_8(%arg0: i32) -> (i32, i32) {
    %c0_i32 = arith.constant 0 : i32
    %c0_i32_0 = arith.constant 0 : i32
    %c0_i32_1 = arith.constant 0 : i32
    return %c0_i32, %c0_i32_0 : i32, i32
  }
  func.func @transform_9(%arg0: i32) -> (i32, i32) {
    %c0_i32 = arith.constant 0 : i32
    %c0_i32_0 = arith.constant 0 : i32
    %c0_i32_1 = arith.constant 0 : i32
    return %c0_i32, %c0_i32_0 : i32, i32
  }
  func.func @transform_10(%arg0: i32) -> (i32, i32) {
    %c0_i32 = arith.constant 0 : i32
    %c0_i32_0 = arith.constant 0 : i32
    return %arg0, %c0_i32 : i32, i32
  }
}

</mosaic_0001>

<llo_original>
// kernel: tpu_custom_call.1
$region0: #{tpu_custom_call.1}
  #allocation0 [shape = 'u32[]', space=smem, size = 0x4, offset = 0x4, fixed_abs, tag = 'smem constant byte address 0x4 - core index']
  #allocation1 [shape = 'u32[72,128]{1,0:T(1,128)}', space=vmem, size = 0x9000, scoped, tag = 'internal scratch']
  %s0 = inlined_call_operand.vmem [shape: f32[16,1], index: 0, kind: input, shape index: {}]
  %s1 = inlined_call_operand.vmem [shape: f32[1,256], index: 1, kind: input, shape index: {}]
  %s2 = inlined_call_operand.hbm [shape: bf16[2,256,256], index: 2, kind: input, shape index: {}]
  %s3 = inlined_call_operand.vmem [shape: f32[3,1,256], index: 3, kind: input, shape index: {}]
  %s4 = inlined_call_operand.vmem [shape: f32[3,1,256], index: 4, kind: input, shape index: {}]
  %s5 = inlined_call_operand.vmem [shape: f32[3,1,256], index: 5, kind: input, shape index: {}]
  %s6 = inlined_call_operand.vmem [shape: bf16[256,4], index: 6, kind: input, shape index: {}]
  %s7 = inlined_call_operand.vmem [shape: f32[1,4], index: 7, kind: input, shape index: {}]
  %s8 = inlined_call_operand.vmem [shape: f32[256,4], index: 8, kind: input, shape index: {}]
  %s9 = inlined_call_operand.vmem [shape: f32[4,256], index: 9, kind: input, shape index: {}]
  %s10 = inlined_call_operand.vmem [shape: f32[16,4], index: 10, kind: output, shape index: {}]
  %s11 = sld [smem:[#allocation0]]
  $region54: #{tpu_custom_call.1} parent=0
    _
  %s13 = ssub.s32 1, %s11
  %s14 = scalar_select 0, %s13, %s11
  $region1: #{tpu_custom_call.1} parent=0
    #allocation2 [shape = 'u8[262144]{0}', space=vmem, size = 0x40000, scoped, tag = 'input window, operand 2, single buffered']
    #allocation3 [shape = 's32[1]{0}', space=sflag, size = 0x4, scoped, tag = 'scoped memory for tpu_custom_call.1']
    %15 = vsyncpa [#allocation3], 0
    // Predicated region
    $region2: #{tpu_custom_call.1} parent=1 // pred_check
      _
    $region3: #{tpu_custom_call.1} parent=1 // pred_check_branch
      %17 = sbr.rel (0) target = $region5
    $region4: #{tpu_custom_call.1} parent=1 // pred_region
      _
    $region5: #{tpu_custom_call.1} parent=1 // pred_fallthru
      _
    // Predicated region
    $region6: #{tpu_custom_call.1} parent=1 // pred_check
      _
    $region7: #{tpu_custom_call.1} parent=1 // pred_check_branch
      %19 = sbr.rel (0) target = $region9
    $region8: #{tpu_custom_call.1} parent=1 // pred_region
      _
    $region9: #{tpu_custom_call.1} parent=1 // pred_fallthru
      _
    // Predicated region
    $region10: #{tpu_custom_call.1} parent=1 // pred_check
      _
    $region11: #{tpu_custom_call.1} parent=1 // pred_check_branch
      %21 = sbr.rel (0) target = $region13
    $region12: #{tpu_custom_call.1} parent=1 // pred_region
      %23 = vsyncadd [#allocation3], 0
      %s24 = sshll.u32 %s2, 4
      %s25 = int_to_ptr.hbm [resolvable:$true] %s24
      %s26 = sshll.u32 [#allocation2], 4
      %s27 = int_to_ptr.vmem [resolvable:$true] %s26
      %32 = dma.hbm_to_vmem [thread:$0]  %s25, 8192, %s27, [#allocation3], 128, 128, 8
    $region13: #{tpu_custom_call.1} parent=1 // pred_fallthru
      _
    // Predicated region
    $region14: #{tpu_custom_call.1} parent=1 // pred_check
      _
    $region15: #{tpu_custom_call.1} parent=1 // pred_check_branch
      %34 = sbr.rel (0) target = $region17
    $region16: #{tpu_custom_call.1} parent=1 // pred_region
      _
    $region17: #{tpu_custom_call.1} parent=1 // pred_fallthru
      _
    // Predicated region
    $region18: #{tpu_custom_call.1} parent=1 // pred_check
      _
    $region19: #{tpu_custom_call.1} parent=1 // pred_check_branch
      %36 = sbr.rel (0) target = $region21
    $region20: #{tpu_custom_call.1} parent=1 // pred_region
      _
    $region21: #{tpu_custom_call.1} parent=1 // pred_fallthru
      _
    // Predicated region
    $region22: #{tpu_custom_call.1} parent=1 // pred_check
      _
    $region23: #{tpu_custom_call.1} parent=1 // pred_check_branch
      %38 = sbr.rel (0) target = $region25
    $region24: #{tpu_custom_call.1} parent=1 // pred_region
      _
    $region25: #{tpu_custom_call.1} parent=1 // pred_fallthru
      _
    // Predicated region
    $region26: #{tpu_custom_call.1} parent=1 // pred_check
      _
    $region27: #{tpu_custom_call.1} parent=1 // pred_check_branch
      %40 = sbr.rel (0) target = $region29
    $region28: #{tpu_custom_call.1} parent=1 // pred_region
      _
    $region29: #{tpu_custom_call.1} parent=1 // pred_fallthru
      _
    // Predicated region
    $region30: #{tpu_custom_call.1} parent=1 // pred_check
      _
    $region31: #{tpu_custom_call.1} parent=1 // pred_check_branch
      %42 = sbr.rel (0) target = $region33
    $region32: #{tpu_custom_call.1} parent=1 // pred_region
      _
    $region33: #{tpu_custom_call.1} parent=1 // pred_fallthru
      _
    // Predicated region
    $region34: #{tpu_custom_call.1} parent=1 // pred_check
      _
    $region35: #{tpu_custom_call.1} parent=1 // pred_check_branch
      %44 = sbr.rel (0) target = $region37
    $region36: #{tpu_custom_call.1} parent=1 // pred_region
      _
    $region37: #{tpu_custom_call.1} parent=1 // pred_fallthru
      _
    // Predicated region
    $region38: #{tpu_custom_call.1} parent=1 // pred_check
      _
    $region39: #{tpu_custom_call.1} parent=1 // pred_check_branch
      %46 = sbr.rel (0) target = $region41
    $region40: #{tpu_custom_call.1} parent=1 // pred_region
      _
    $region41: #{tpu_custom_call.1} parent=1 // pred_fallthru
      _
    // Predicated region
    $region42: #{tpu_custom_call.1} parent=1 // pred_check
      _
    $region43: #{tpu_custom_call.1} parent=1 // pred_check_branch
      %48 = sbr.rel (0) target = $region45
    $region44: #{tpu_custom_call.1} parent=1 // pred_region
      %50 = dma.done [#allocation3], 8192
    $region45: #{tpu_custom_call.1} parent=1 // pred_fallthru
      _
    %v51 = vld [vmem:[%s8] sm:$0xff]
    %v52 = vld [vmem:[%s8 + $0x8] sm:$0xff]
    %v53 = vld [vmem:[%s8 + $0x10] sm:$0xff]
    %v54 = vld [vmem:[%s8 + $0x18] sm:$0xff]
    %v55 = vld [vmem:[%s8 + $0x20] sm:$0xff]
    %v56 = vld [vmem:[%s8 + $0x28] sm:$0xff]
    %v57 = vld [vmem:[%s8 + $0x30] sm:$0xff]
    %v58 = vld [vmem:[%s8 + $0x38] sm:$0xff]
    %v59 = vld [vmem:[%s8 + $0x40] sm:$0xff]
    %v60 = vld [vmem:[%s8 + $0x48] sm:$0xff]
    %v61 = vld [vmem:[%s8 + $0x50] sm:$0xff]
    %v62 = vld [vmem:[%s8 + $0x58] sm:$0xff]
    %v63 = vld [vmem:[%s8 + $0x60] sm:$0xff]
    %v64 = vld [vmem:[%s8 + $0x68] sm:$0xff]
    %v65 = vld [vmem:[%s8 + $0x70] sm:$0xff]
    %v66 = vld [vmem:[%s8 + $0x78] sm:$0xff]
    %v67 = vld [vmem:[%s8 + $0x80] sm:$0xff]
    %v68 = vld [vmem:[%s8 + $0x88] sm:$0xff]
    %v69 = vld [vmem:[%s8 + $0x90] sm:$0xff]
    %v70 = vld [vmem:[%s8 + $0x98] sm:$0xff]
    %v71 = vld [vmem:[%s8 + $0xa0] sm:$0xff]
    %v72 = vld [vmem:[%s8 + $0xa8] sm:$0xff]
    %v73 = vld [vmem:[%s8 + $0xb0] sm:$0xff]
    %v74 = vld [vmem:[%s8 + $0xb8] sm:$0xff]
    %v75 = vld [vmem:[%s8 + $0xc0] sm:$0xff]
    %v76 = vld [vmem:[%s8 + $0xc8] sm:$0xff]
    %v77 = vld [vmem:[%s8 + $0xd0] sm:$0xff]
    %v78 = vld [vmem:[%s8 + $0xd8] sm:$0xff]
    %v79 = vld [vmem:[%s8 + $0xe0] sm:$0xff]
    %v80 = vld [vmem:[%s8 + $0xe8] sm:$0xff]
    %v81 = vld [vmem:[%s8 + $0xf0] sm:$0xff]
    %v82 = vld [vmem:[%s8 + $0xf8] sm:$0xff]
    %v83 = vld [vmem:[%s9] sm:$0xff]
    %v84 = vld [vmem:[%s0] sm:$0xff]
    %v85 = vld [vmem:[%s0 + $0x8] sm:$0xff]
    %v86 = vld [vmem:[%s1] sm:$0x3]
    %88 = vset.pattern.permute.xlu0 0
    %89 = vperm.xlu0 %88, %v84
    %v90 = vpop.permute.xlu0 %89
    %93 = vset.pattern.permute.xlu0 0
    %94 = vperm.xlu0 %93, %v85
    %v95 = vpop.permute.xlu0 %94
    %v98 = vperm.slane %v86, 0
    %v99 = vperm.slane %v86, 1
    %v102 = vmul.f32 %v90, %v98
    %v103 = vmul.f32 %v90, %v99
    %v104 = vmul.f32 %v95, %v98
    %v105 = vmul.f32 %v95, %v99
    %v106 = vld [vmem:[%s3] sm:$0x3]
    %v108 = vperm.slane %v106, 0
    %v109 = vperm.slane %v106, 1
    %v112 = vadd.f32 %v102, %v108
    %v113 = vadd.f32 %v103, %v109
    %v114 = vadd.f32 %v104, %v108
    %v115 = vadd.f32 %v105, %v109
    %v116 = vld [vmem:[%s4] sm:$0x3]
    %v117 = vld [vmem:[%s5] sm:$0x3]
    %v118 = vmul.f32 %v112, %v112
    %v119 = vmul.f32 %v113, %v113
    %v120 = vmul.f32 %v114, %v114
    %v121 = vmul.f32 %v115, %v115
    %122 = vmatpush.msra.mxu0 %v66
    %123 = vmatpush.msra.mxu0 %v65
    %124 = vmatpush.msra.mxu0 %v64
    %125 = vmatpush.msra.mxu0 %v63
    %126 = vmatpush.msra.mxu0 %v62
    %127 = vmatpush.msra.mxu0 %v61
    %128 = vmatpush.msra.mxu0 %v60
    %129 = vmatpush.msra.mxu0 %v59
    %130 = vmatpush.msra.mxu0 %v58
    %131 = vmatpush.msra.mxu0 %v57
    %132 = vmatpush.msra.mxu0 %v56
    %133 = vmatpush.msra.mxu0 %v55
    %134 = vmatpush.msra.mxu0 %v54
    %135 = vmatpush.msra.mxu0 %v53
    %136 = vmatpush.msra.mxu0 %v52
    %137 = vmatpush.msra.mxu0 %v51
    %138 = vmatmul.f32.gmra.mxu0 %v112
    %v139 = vpop.f32.mrf.mxu0
    %v140 = vadd.f32 0.0, %v139
    %141 = vmatmul.f32.gmra.mxu0 %v114
    %v142 = vpop.f32.mrf.mxu0
    %v143 = vadd.f32 0.0, %v142
    %144 = vmatmul.f32.gmra.mxu0 %v118
    %v145 = vpop.f32.mrf.mxu0
    %v146 = vadd.f32 0.0, %v145
    %147 = vmatmul.f32.gmra.mxu0 %v120
    %v148 = vpop.f32.mrf.mxu0
    %v149 = vadd.f32 0.0, %v148
    %150 = vdwg.mxu0
    %151 = vmatpush.msra.mxu0 %v82
    %152 = vmatpush.msra.mxu0 %v81
    %153 = vmatpush.msra.mxu0 %v80
    %154 = vmatpush.msra.mxu0 %v79
    %155 = vmatpush.msra.mxu0 %v78
    %156 = vmatpush.msra.mxu0 %v77
    %157 = vmatpush.msra.mxu0 %v76
    %158 = vmatpush.msra.mxu0 %v75
    %159 = vmatpush.msra.mxu0 %v74
    %160 = vmatpush.msra.mxu0 %v73
    %161 = vmatpush.msra.mxu0 %v72
    %162 = vmatpush.msra.mxu0 %v71
    %163 = vmatpush.msra.mxu0 %v70
    %164 = vmatpush.msra.mxu0 %v69
    %165 = vmatpush.msra.mxu0 %v68
    %166 = vmatpush.msra.mxu0 %v67
    %167 = vmatmul.f32.gmra.mxu0 %v113
    %v168 = vpop.f32.mrf.mxu0
    %v169 = vadd.f32 %v140, %v168
    %170 = vmatmul.f32.gmra.mxu0 %v115
    %v171 = vpop.f32.mrf.mxu0
    %v172 = vadd.f32 %v143, %v171
    %173 = vmatmul.f32.gmra.mxu0 %v119
    %v174 = vpop.f32.mrf.mxu0
    %v175 = vadd.f32 %v146, %v174
    %176 = vmatmul.f32.gmra.mxu0 %v121
    %v177 = vpop.f32.mrf.mxu0
    %v178 = vadd.f32 %v149, %v177
    %179 = vdwg.mxu0
    %v180 = vmul.f32 %v169, 0.015625
    %v181 = vmul.f32 %v172, 0.015625
    %v182 = vmul.f32 %v169, %v180
    %v183 = vmul.f32 %v172, %v181
    %v184 = vsub.f32 %v175, %v182
    %v185 = vsub.f32 %v178, %v183
    %v186 = vmax.f32 %v184, 0.0
    %v187 = vmax.f32 %v185, 0.0
    %v188 = vmul.f32 %v186, 0.015873017
    %v189 = vmul.f32 %v187, 0.015873017
    %v190 = vrsqrt.pop %v188
    %v191 = vmul.f32 %v190, %v188
    %v192 = vmul.f32 %v191, %v190
    %v193 = vmul.f32 0.5, %v192
    %v194 = vsub.f32 1.5, %v193
    %v195 = vmul.f32 %v190, %v194
    %v196 = vmul.f32 %v188, %v195
    %vm197 = vcmp.eq.f32.partialorder %v188, inf
    %v198 = vsel %vm197, %v188, %v196
    %vm199 = vcmp.eq.f32.partialorder %v188, 0.0
    %v200 = vand.u32 %v188, 2147483648
    %v201 = vsel %vm199, %v200, %v198
    %v202 = vrsqrt.pop %v189
    %v203 = vmul.f32 %v202, %v189
    %v204 = vmul.f32 %v203, %v202
    %v205 = vmul.f32 0.5, %v204
    %v206 = vsub.f32 1.5, %v205
    %v207 = vmul.f32 %v202, %v206
    %v208 = vmul.f32 %v189, %v207
    %vm209 = vcmp.eq.f32.partialorder %v189, inf
    %v210 = vsel %vm209, %v189, %v208
    %vm211 = vcmp.eq.f32.partialorder %v189, 0.0
    %v212 = vand.u32 %v189, 2147483648
    %v213 = vsel %vm211, %v212, %v210
    %v214 = vadd.f32 %v201, 1e-06
    %v215 = vadd.f32 %v213, 1e-06
    %v216 = vrcp.pop %v214
    %v217 = vmul.f32 %v214, %v216
    %v218 = vsub.f32 1.0, %v217
    %v219 = vmul.f32 %v216, %v218
    %v220 = vadd.f32 %v216, %v219
    %vm221 = vweird.f32 %v214
    %vm222 = vweird.f32 %v216
    %vm223 = vmor %vm221, %vm222
    %v224 = vsel %vm223, %v216, %v220
    %v225 = vand.u32 2147483647, %v214
    %vm226 = vcmp.eq.f32.partialorder %v225, 8.507059e+37
    %v227 = vand.u32 %v214, 2147483648
    %v228 = vor.u32 1.1754944e-38, %v227
    %v229 = vsel %vm226, %v228, %v224
    %v230 = vrcp.pop %v215
    %v231 = vmul.f32 %v215, %v230
    %v232 = vsub.f32 1.0, %v231
    %v233 = vmul.f32 %v230, %v232
    %v234 = vadd.f32 %v230, %v233
    %vm235 = vweird.f32 %v215
    %vm236 = vweird.f32 %v230
    %vm237 = vmor %vm235, %vm236
    %v238 = vsel %vm237, %v230, %v234
    %v239 = vand.u32 2147483647, %v215
    %vm240 = vcmp.eq.f32.partialorder %v239, 8.507059e+37
    %v241 = vand.u32 %v215, 2147483648
    %v242 = vor.u32 1.1754944e-38, %v241
    %v243 = vsel %vm240, %v242, %v238
    %245 = vst [vmem:[#allocation1] ss:$2 sm:$0xff] %v83
    %v246 = vld.sshfl [vmem:[#allocation1] sm:$0xff pattern:$0x75316420]
    %v247 = vld.sshfl [vmem:[#allocation1 + $0x8] sm:$0xff pattern:$0x75316420]
    %vm248 = vcmask 31744
    %v250 = vsel %vm248, %v180, 0
    %v253 = vsel %vm248, %v181, 0
    %v256 = vsel %vm248, %v229, 0
    %v259 = vsel %vm248, %v243, 0
    %vm261 = vcmask 1043456
    %v262 = vsel %vm261, %v246, 0
    %v264 = vsel %vm261, %v247, 0
    %266 = vmatpush.msra.mxu0 0.0
    %267 = vmatpush.msra.mxu0 0.0
    %268 = vmatpush.msra.mxu0 0.0
    %269 = vmatpush.msra.mxu0 0.0
    %270 = vmatpush.msra.mxu0 0.0
    %271 = vmatpush.msra.mxu0 0.0
    %272 = vmatpush.msra.mxu0 0.0
    %273 = vmatpush.msra.mxu0 0.0
    %274 = vmatpush.msra.mxu0 0.0
    %275 = vmatpush.msra.mxu0 0.0
    %276 = vmatpush.msra.mxu0 0.0
    %277 = vmatpush.msra.mxu0 0.0
    %278 = vmatpush.msra.mxu0 0.0
    %279 = vmatpush.msra.mxu0 0.0
    %280 = vmatpush.msra.mxu0 0.0
    %281 = vmatpush.msra.mxu0 %v262
    %282 = vmatmul.f32.gmra.mxu0 %v250
    %v283 = vpop.f32.mrf.mxu0
    %v284 = vadd.f32 0.0, %v283
    %285 = vmatmul.f32.gmra.mxu0 %v253
    %v286 = vpop.f32.mrf.mxu0
    %v287 = vadd.f32 0.0, %v286
    %288 = vmatmul.f32.gmra.mxu0 %v256
    %v289 = vpop.f32.mrf.mxu0
    %v290 = vadd.f32 0.0, %v289
    %291 = vmatmul.f32.gmra.mxu0 %v259
    %v292 = vpop.f32.mrf.mxu0
    %v293 = vadd.f32 0.0, %v292
    %294 = vdwg.mxu0
    %295 = vmatpush.msra.mxu0 0.0
    %296 = vmatpush.msra.mxu0 0.0
    %297 = vmatpush.msra.mxu0 0.0
    %298 = vmatpush.msra.mxu0 0.0
    %299 = vmatpush.msra.mxu0 0.0
    %300 = vmatpush.msra.mxu0 0.0
    %301 = vmatpush.msra.mxu0 0.0
    %302 = vmatpush.msra.mxu0 0.0
    %303 = vmatpush.msra.mxu0 0.0
    %304 = vmatpush.msra.mxu0 0.0
    %305 = vmatpush.msra.mxu0 0.0
    %306 = vmatpush.msra.mxu0 0.0
    %307 = vmatpush.msra.mxu0 0.0
    %308 = vmatpush.msra.mxu0 0.0
    %309 = vmatpush.msra.mxu0 0.0
    %310 = vmatpush.msra.mxu0 %v264
    %311 = vmatmul.f32.gmra.mxu0 %v250
    %v312 = vpop.f32.mrf.mxu0
    %v313 = vadd.f32 0.0, %v312
    %314 = vmatmul.f32.gmra.mxu0 %v253
    %v315 = vpop.f32.mrf.mxu0
    %v316 = vadd.f32 0.0, %v315
    %317 = vmatmul.f32.gmra.mxu0 %v256
    %v318 = vpop.f32.mrf.mxu0
    %v319 = vadd.f32 0.0, %v318
    %320 = vmatmul.f32.gmra.mxu0 %v259
    %v321 = vpop.f32.mrf.mxu0
    %v322 = vadd.f32 0.0, %v321
    %323 = vdwg.mxu0
    %v324 = vsub.f32 %v112, %v284
    %v325 = vsub.f32 %v113, %v313
    %v326 = vsub.f32 %v114, %v287
    %v327 = vsub.f32 %v115, %v316
    %v328 = vmul.f32 %v324, %v290
    %v329 = vmul.f32 %v325, %v319
    %v330 = vmul.f32 %v326, %v293
    %v331 = vmul.f32 %v327, %v322
    %v333 = vperm.slane %v116, 0
    %v334 = vperm.slane %v116, 1
    %v337 = vmul.f32 %v328, %v333
    %v338 = vmul.f32 %v329, %v334
    %v339 = vmul.f32 %v330, %v333
    %v340 = vmul.f32 %v331, %v334
    %v342 = vperm.slane %v117, 0
    %v343 = vperm.slane %v117, 1
    %v346 = vadd.f32 %v337, %v342
    %v347 = vadd.f32 %v338, %v343
    %v348 = vadd.f32 %v339, %v342
    %v349 = vadd.f32 %v340, %v343
    %v350 = vadd.f32 %v112, %v346
    %v351 = vadd.f32 %v113, %v347
    %v352 = vadd.f32 %v114, %v348
    %v353 = vadd.f32 %v115, %v349
    %vm354 = vcmp.gt.f32.partialorder %v350, 0.0
    %vm355 = vcmp.gt.f32.partialorder %v351, 0.0
    %vm356 = vcmp.gt.f32.partialorder %v352, 0.0
    %vm357 = vcmp.gt.f32.partialorder %v353, 0.0
    %v358 = vmin.f32 %v350, 0.0
    %v359 = vmin.f32 %v351, 0.0
    %v360 = vmin.f32 %v352, 0.0
    %v361 = vmin.f32 %v353, 0.0
    %v362 = vmul.f32 %v358, 1.442695
    %v363 = vpow.pop %v362
    %v364 = vmul.f32 %v359, 1.442695
    %v365 = vpow.pop %v364
    %v366 = vmul.f32 %v360, 1.442695
    %v367 = vpow.pop %v366
    %v368 = vmul.f32 %v361, 1.442695
    %v369 = vpow.pop %v368
    %v370 = vsub.f32 %v363, 1.0
    %v371 = vsub.f32 %v365, 1.0
    %v372 = vsub.f32 %v367, 1.0
    %v373 = vsub.f32 %v369, 1.0
    %v374 = vmul.f32 %v370, 1.6732632
    %v375 = vmul.f32 %v371, 1.6732632
    %v376 = vmul.f32 %v372, 1.6732632
    %v377 = vmul.f32 %v373, 1.6732632
    %v378 = vsel %vm354, %v350, %v374
    %v379 = vsel %vm355, %v351, %v375
    %v380 = vsel %vm356, %v352, %v376
    %v381 = vsel %vm357, %v353, %v377
    %v382 = vmul.f32 %v378, 1.050701
    %v383 = vmul.f32 %v379, 1.050701
    %v384 = vmul.f32 %v380, 1.050701
    %v385 = vmul.f32 %v381, 1.050701
    %v386 = vpack.c.bf16 %v384, %v382
    %v387 = vpack.c.bf16 %v385, %v383
    %v388 = vld [vmem:[#allocation2] sm:$0xff]
    %v389 = vld [vmem:[#allocation2 + $0x8] sm:$0xff]
    %v390 = vld [vmem:[#allocation2 + $0x10] sm:$0xff]
    %v391 = vld [vmem:[#allocation2 + $0x18] sm:$0xff]
    %v392 = vld [vmem:[#allocation2 + $0x20] sm:$0xff]
    %v393 = vld [vmem:[#allocation2 + $0x28] sm:$0xff]
    %v394 = vld [vmem:[#allocation2 + $0x30] sm:$0xff]
    %v395 = vld [vmem:[#allocation2 + $0x38] sm:$0xff]
    %v396 = vld [vmem:[#allocation2 + $0x40] sm:$0xff]
    %v397 = vld [vmem:[#allocation2 + $0x48] sm:$0xff]
    %v398 = vld [vmem:[#allocation2 + $0x50] sm:$0xff]
    %v399 = vld [vmem:[#allocation2 + $0x58] sm:$0xff]
    %v400 = vld [vmem:[#allocation2 + $0x60] sm:$0xff]
    %v401 = vld [vmem:[#allocation2 + $0x68] sm:$0xff]
    %v402 = vld [vmem:[#allocation2 + $0x70] sm:$0xff]
    %v403 = vld [vmem:[#allocation2 + $0x78] sm:$0xff]
    %v404 = vld [vmem:[#allocation2 + $0x80] sm:$0xff]
    %v405 = vld [vmem:[#allocation2 + $0x88] sm:$0xff]
    %v406 = vld [vmem:[#allocation2 + $0x90] sm:$0xff]
    %v407 = vld [vmem:[#allocation2 + $0x98] sm:$0xff]
    %v408 = vld [vmem:[#allocation2 + $0xa0] sm:$0xff]
    %v409 = vld [vmem:[#allocation2 + $0xa8] sm:$0xff]
    %v410 = vld [vmem:[#allocation2 + $0xb0] sm:$0xff]
    %v411 = vld [vmem:[#allocation2 + $0xb8] sm:$0xff]
    %v412 = vld [vmem:[#allocation2 + $0xc0] sm:$0xff]
    %v413 = vld [vmem:[#allocation2 + $0xc8] sm:$0xff]
    %v414 = vld [vmem:[#allocation2 + $0xd0] sm:$0xff]
    %v415 = vld [vmem:[#allocation2 + $0xd8] sm:$0xff]
    %v416 = vld [vmem:[#allocation2 + $0xe0] sm:$0xff]
    %v417 = vld [vmem:[#allocation2 + $0xe8] sm:$0xff]
    %v418 = vld [vmem:[#allocation2 + $0xf0] sm:$0xff]
    %v419 = vld [vmem:[#allocation2 + $0xf8] sm:$0xff]
    %s420 = scalar_lea.vmem %s3, 2
    %v421 = vld [vmem:[%s420] sm:$0x3]
    %v423 = vperm.slane %v421, 0
    %v424 = vperm.slane %v421, 1
    %v459 = vunpack.c.l.b16 %v388
    %v460 = vunpack.c.h.b16 %v388
    %v461 = vunpack.c.l.b16 %v389
    %v462 = vunpack.c.h.b16 %v389
    %v463 = vunpack.c.l.b16 %v390
    %v464 = vunpack.c.h.b16 %v390
    %v465 = vunpack.c.l.b16 %v391
    %v466 = vunpack.c.h.b16 %v391
    %v467 = vunpack.c.l.b16 %v392
    %v468 = vunpack.c.h.b16 %v392
    %v469 = vunpack.c.l.b16 %v393
    %v470 = vunpack.c.h.b16 %v393
    %v471 = vunpack.c.l.b16 %v394
    %v472 = vunpack.c.h.b16 %v394
    %v473 = vunpack.c.l.b16 %v395
    %v474 = vunpack.c.h.b16 %v395
    %v475 = vunpack.c.l.b16 %v396
    %v476 = vunpack.c.h.b16 %v396
    %v477 = vunpack.c.l.b16 %v397
    %v478 = vunpack.c.h.b16 %v397
    %v479 = vunpack.c.l.b16 %v398
    %v480 = vunpack.c.h.b16 %v398
    %v481 = vunpack.c.l.b16 %v399
    %v482 = vunpack.c.h.b16 %v399
    %v483 = vunpack.c.l.b16 %v400
    %v484 = vunpack.c.h.b16 %v400
    %v485 = vunpack.c.l.b16 %v401
    %v486 = vunpack.c.h.b16 %v401
    %v487 = vunpack.c.l.b16 %v402
    %v488 = vunpack.c.h.b16 %v402
    %v489 = vunpack.c.l.b16 %v403
    %v490 = vunpack.c.h.b16 %v403
    %v491 = vunpack.c.l.b16 %v404
    %v492 = vunpack.c.h.b16 %v404
    %v493 = vunpack.c.l.b16 %v405
    %v494 = vunpack.c.h.b16 %v405
    %v495 = vunpack.c.l.b16 %v406
    %v496 = vunpack.c.h.b16 %v406
    %v497 = vunpack.c.l.b16 %v407
    %v498 = vunpack.c.h.b16 %v407
    %v499 = vunpack.c.l.b16 %v408
    %v500 = vunpack.c.h.b16 %v408
    %v501 = vunpack.c.l.b16 %v409
    %v502 = vunpack.c.h.b16 %v409
    %v503 = vunpack.c.l.b16 %v410
    %v504 = vunpack.c.h.b16 %v410
    %v505 = vunpack.c.l.b16 %v411
    %v506 = vunpack.c.h.b16 %v411
    %v507 = vunpack.c.l.b16 %v412
    %v508 = vunpack.c.h.b16 %v412
    %v509 = vunpack.c.l.b16 %v413
    %v510 = vunpack.c.h.b16 %v413
    %v511 = vunpack.c.l.b16 %v414
    %v512 = vunpack.c.h.b16 %v414
    %v513 = vunpack.c.l.b16 %v415
    %v514 = vunpack.c.h.b16 %v415
    %v515 = vunpack.c.l.b16 %v416
    %v516 = vunpack.c.h.b16 %v416
    %v517 = vunpack.c.l.b16 %v417
    %v518 = vunpack.c.h.b16 %v417
    %v519 = vunpack.c.l.b16 %v418
    %v520 = vunpack.c.h.b16 %v418
    %v521 = vunpack.c.l.b16 %v419
    %v522 = vunpack.c.h.b16 %v419
    %v523 = vpack.c.b16 %v461, %v459
    %v524 = vpack.c.b16 %v462, %v460
    %v525 = vpack.c.b16 %v465, %v463
    %v526 = vpack.c.b16 %v466, %v464
    %v527 = vpack.c.b16 %v469, %v467
    %v528 = vpack.c.b16 %v470, %v468
    %v529 = vpack.c.b16 %v473, %v471
    %v530 = vpack.c.b16 %v474, %v472
    %v531 = vpack.c.b16 %v477, %v475
    %v532 = vpack.c.b16 %v478, %v476
    %v533 = vpack.c.b16 %v481, %v479
    %v534 = vpack.c.b16 %v482, %v480
    %v535 = vpack.c.b16 %v485, %v483
    %v536 = vpack.c.b16 %v486, %v484
    %v537 = vpack.c.b16 %v489, %v487
    %v538 = vpack.c.b16 %v490, %v488
    %v539 = vpack.c.b16 %v493, %v491
    %v540 = vpack.c.b16 %v494, %v492
    %v541 = vpack.c.b16 %v497, %v495
    %v542 = vpack.c.b16 %v498, %v496
    %v543 = vpack.c.b16 %v501, %v499
    %v544 = vpack.c.b16 %v502, %v500
    %v545 = vpack.c.b16 %v505, %v503
    %v546 = vpack.c.b16 %v506, %v504
    %v547 = vpack.c.b16 %v509, %v507
    %v548 = vpack.c.b16 %v510, %v508
    %v549 = vpack.c.b16 %v513, %v511
    %v550 = vpack.c.b16 %v514, %v512
    %v551 = vpack.c.b16 %v517, %v515
    %v552 = vpack.c.b16 %v518, %v516
    %v553 = vpack.c.b16 %v521, %v519
    %v554 = vpack.c.b16 %v522, %v520
    %587 = vmatpush.bf16.msra.mxu0 %v537
    %588 = vmatpush.bf16.msra.mxu0 %v535
    %589 = vmatpush.bf16.msra.mxu0 %v533
    %590 = vmatpush.bf16.msra.mxu0 %v531
    %591 = vmatpush.bf16.msra.mxu0 %v529
    %592 = vmatpush.bf16.msra.mxu0 %v527
    %593 = vmatpush.bf16.msra.mxu0 %v525
    %594 = vmatpush.bf16.msra.mxu0 %v523
    %595 = vmatmul.bf16.gmra.mxu0 %v386
    %v596 = vpop.f32.mrf.mxu0
    %v597 = vadd.f32 %v423, %v596
    %v598 = vpop.f32.mrf.mxu0
    %v599 = vadd.f32 %v423, %v598
    %600 = vdwg.mxu0
    %601 = vmatpush.bf16.msra.mxu0 %v553
    %602 = vmatpush.bf16.msra.mxu0 %v551
    %603 = vmatpush.bf16.msra.mxu0 %v549
    %604 = vmatpush.bf16.msra.mxu0 %v547
    %605 = vmatpush.bf16.msra.mxu0 %v545
    %606 = vmatpush.bf16.msra.mxu0 %v543
    %607 = vmatpush.bf16.msra.mxu0 %v541
    %608 = vmatpush.bf16.msra.mxu0 %v539
    %609 = vmatmul.bf16.gmra.mxu0 %v387
    %v610 = vpop.f32.mrf.mxu0
    %v611 = vadd.f32 %v597, %v610
    %v612 = vpop.f32.mrf.mxu0
    %v613 = vadd.f32 %v599, %v612
    %614 = vdwg.mxu0
    %615 = vmatpush.bf16.msra.mxu0 %v538
    %616 = vmatpush.bf16.msra.mxu0 %v536
    %617 = vmatpush.bf16.msra.mxu0 %v534
    %618 = vmatpush.bf16.msra.mxu0 %v532
    %619 = vmatpush.bf16.msra.mxu0 %v530
    %620 = vmatpush.bf16.msra.mxu0 %v528
    %621 = vmatpush.bf16.msra.mxu0 %v526
    %622 = vmatpush.bf16.msra.mxu0 %v524
    %623 = vmatmul.bf16.gmra.mxu0 %v386
    %v624 = vpop.f32.mrf.mxu0
    %v625 = vadd.f32 %v424, %v624
    %v626 = vpop.f32.mrf.mxu0
    %v627 = vadd.f32 %v424, %v626
    %628 = vdwg.mxu0
    %629 = vmatpush.bf16.msra.mxu0 %v554
    %630 = vmatpush.bf16.msra.mxu0 %v552
    %631 = vmatpush.bf16.msra.mxu0 %v550
    %632 = vmatpush.bf16.msra.mxu0 %v548
    %633 = vmatpush.bf16.msra.mxu0 %v546
    %634 = vmatpush.bf16.msra.mxu0 %v544
    %635 = vmatpush.bf16.msra.mxu0 %v542
    %636 = vmatpush.bf16.msra.mxu0 %v540
    %637 = vmatmul.bf16.gmra.mxu0 %v387
    %v638 = vpop.f32.mrf.mxu0
    %v639 = vadd.f32 %v625, %v638
    %v640 = vpop.f32.mrf.mxu0
    %v641 = vadd.f32 %v627, %v640
    %642 = vdwg.mxu0
    %s643 = scalar_lea.vmem %s4, 2
    %v644 = vld [vmem:[%s643] sm:$0x3]
    %s645 = scalar_lea.vmem %s5, 2
    %v646 = vld [vmem:[%s645] sm:$0x3]
    %v647 = vmul.f32 %v611, %v611
    %v648 = vmul.f32 %v639, %v639
    %v649 = vmul.f32 %v613, %v613
    %v650 = vmul.f32 %v641, %v641
    %651 = vmatpush.msra.mxu0 %v66
    %652 = vmatpush.msra.mxu0 %v65
    %653 = vmatpush.msra.mxu0 %v64
    %654 = vmatpush.msra.mxu0 %v63
    %655 = vmatpush.msra.mxu0 %v62
    %656 = vmatpush.msra.mxu0 %v61
    %657 = vmatpush.msra.mxu0 %v60
    %658 = vmatpush.msra.mxu0 %v59
    %659 = vmatpush.msra.mxu0 %v58
    %660 = vmatpush.msra.mxu0 %v57
    %661 = vmatpush.msra.mxu0 %v56
    %662 = vmatpush.msra.mxu0 %v55
    %663 = vmatpush.msra.mxu0 %v54
    %664 = vmatpush.msra.mxu0 %v53
    %665 = vmatpush.msra.mxu0 %v52
    %666 = vmatpush.msra.mxu0 %v51
    %667 = vmatmul.f32.gmra.mxu0 %v611
    %v668 = vpop.f32.mrf.mxu0
    %v669 = vadd.f32 0.0, %v668
    %670 = vmatmul.f32.gmra.mxu0 %v613
    %v671 = vpop.f32.mrf.mxu0
    %v672 = vadd.f32 0.0, %v671
    %673 = vmatmul.f32.gmra.mxu0 %v647
    %v674 = vpop.f32.mrf.mxu0
    %v675 = vadd.f32 0.0, %v674
    %676 = vmatmul.f32.gmra.mxu0 %v649
    %v677 = vpop.f32.mrf.mxu0
    %v678 = vadd.f32 0.0, %v677
    %679 = vdwg.mxu0
    %680 = vmatpush.msra.mxu0 %v82
    %681 = vmatpush.msra.mxu0 %v81
    %682 = vmatpush.msra.mxu0 %v80
    %683 = vmatpush.msra.mxu0 %v79
    %684 = vmatpush.msra.mxu0 %v78
    %685 = vmatpush.msra.mxu0 %v77
    %686 = vmatpush.msra.mxu0 %v76
    %687 = vmatpush.msra.mxu0 %v75
    %688 = vmatpush.msra.mxu0 %v74
    %689 = vmatpush.msra.mxu0 %v73
    %690 = vmatpush.msra.mxu0 %v72
    %691 = vmatpush.msra.mxu0 %v71
    %692 = vmatpush.msra.mxu0 %v70
    %693 = vmatpush.msra.mxu0 %v69
    %694 = vmatpush.msra.mxu0 %v68
    %695 = vmatpush.msra.mxu0 %v67
    %696 = vmatmul.f32.gmra.mxu0 %v639
    %v697 = vpop.f32.mrf.mxu0
    %v698 = vadd.f32 %v669, %v697
    %699 = vmatmul.f32.gmra.mxu0 %v641
    %v700 = vpop.f32.mrf.mxu0
    %v701 = vadd.f32 %v672, %v700
    %702 = vmatmul.f32.gmra.mxu0 %v648
    %v703 = vpop.f32.mrf.mxu0
    %v704 = vadd.f32 %v675, %v703
    %705 = vmatmul.f32.gmra.mxu0 %v650
    %v706 = vpop.f32.mrf.mxu0
    %v707 = vadd.f32 %v678, %v706
    %708 = vdwg.mxu0
    %v709 = vmul.f32 %v698, 0.015625
    %v710 = vmul.f32 %v701, 0.015625
    %v711 = vmul.f32 %v698, %v709
    %v712 = vmul.f32 %v701, %v710
    %v713 = vsub.f32 %v704, %v711
    %v714 = vsub.f32 %v707, %v712
    %v715 = vmax.f32 %v713, 0.0
    %v716 = vmax.f32 %v714, 0.0
    %v717 = vmul.f32 %v715, 0.015873017
    %v718 = vmul.f32 %v716, 0.015873017
    %v719 = vrsqrt.pop %v717
    %v720 = vmul.f32 %v719, %v717
    %v721 = vmul.f32 %v720, %v719
    %v722 = vmul.f32 0.5, %v721
    %v723 = vsub.f32 1.5, %v722
    %v724 = vmul.f32 %v719, %v723
    %v725 = vmul.f32 %v717, %v724
    %vm726 = vcmp.eq.f32.partialorder %v717, inf
    %v727 = vsel %vm726, %v717, %v725
    %vm728 = vcmp.eq.f32.partialorder %v717, 0.0
    %v729 = vand.u32 %v717, 2147483648
    %v730 = vsel %vm728, %v729, %v727
    %v731 = vrsqrt.pop %v718
    %v732 = vmul.f32 %v731, %v718
    %v733 = vmul.f32 %v732, %v731
    %v734 = vmul.f32 0.5, %v733
    %v735 = vsub.f32 1.5, %v734
    %v736 = vmul.f32 %v731, %v735
    %v737 = vmul.f32 %v718, %v736
    %vm738 = vcmp.eq.f32.partialorder %v718, inf
    %v739 = vsel %vm738, %v718, %v737
    %vm740 = vcmp.eq.f32.partialorder %v718, 0.0
    %v741 = vand.u32 %v718, 2147483648
    %v742 = vsel %vm740, %v741, %v739
    %v743 = vadd.f32 %v730, 1e-06
    %v744 = vadd.f32 %v742, 1e-06
    %v745 = vrcp.pop %v743
    %v746 = vmul.f32 %v743, %v745
    %v747 = vsub.f32 1.0, %v746
    %v748 = vmul.f32 %v745, %v747
    %v749 = vadd.f32 %v745, %v748
    %vm750 = vweird.f32 %v743
    %vm751 = vweird.f32 %v745
    %vm752 = vmor %vm750, %vm751
    %v753 = vsel %vm752, %v745, %v749
    %v754 = vand.u32 2147483647, %v743
    %vm755 = vcmp.eq.f32.partialorder %v754, 8.507059e+37
    %v756 = vand.u32 %v743, 2147483648
    %v757 = vor.u32 1.1754944e-38, %v756
    %v758 = vsel %vm755, %v757, %v753
    %v759 = vrcp.pop %v744
    %v760 = vmul.f32 %v744, %v759
    %v761 = vsub.f32 1.0, %v760
    %v762 = vmul.f32 %v759, %v761
    %v763 = vadd.f32 %v759, %v762
    %vm764 = vweird.f32 %v744
    %vm765 = vweird.f32 %v759
    %vm766 = vmor %vm764, %vm765
    %v767 = vsel %vm766, %v759, %v763
    %v768 = vand.u32 2147483647, %v744
    %vm769 = vcmp.eq.f32.partialorder %v768, 8.507059e+37
    %v770 = vand.u32 %v744, 2147483648
    %v771 = vor.u32 1.1754944e-38, %v770
    %v772 = vsel %vm769, %v771, %v767
    %773 = vst [vmem:[#allocation1] ss:$2 sm:$0xff] %v83
    %v774 = vld.sshfl [vmem:[#allocation1] sm:$0xff pattern:$0x75316420]
    %v775 = vld.sshfl [vmem:[#allocation1 + $0x8] sm:$0xff pattern:$0x75316420]
    %v777 = vsel %vm248, %v709, 0
    %v780 = vsel %vm248, %v710, 0
    %v783 = vsel %vm248, %v758, 0
    %v786 = vsel %vm248, %v772, 0
    %v788 = vsel %vm261, %v774, 0
    %v790 = vsel %vm261, %v775, 0
    %792 = vmatpush.msra.mxu0 0.0
    %793 = vmatpush.msra.mxu0 0.0
    %794 = vmatpush.msra.mxu0 0.0
    %795 = vmatpush.msra.mxu0 0.0
    %796 = vmatpush.msra.mxu0 0.0
    %797 = vmatpush.msra.mxu0 0.0
    %798 = vmatpush.msra.mxu0 0.0
    %799 = vmatpush.msra.mxu0 0.0
    %800 = vmatpush.msra.mxu0 0.0
    %801 = vmatpush.msra.mxu0 0.0
    %802 = vmatpush.msra.mxu0 0.0
    %803 = vmatpush.msra.mxu0 0.0
    %804 = vmatpush.msra.mxu0 0.0
    %805 = vmatpush.msra.mxu0 0.0
    %806 = vmatpush.msra.mxu0 0.0
    %807 = vmatpush.msra.mxu0 %v788
    %808 = vmatmul.f32.gmra.mxu0 %v777
    %v809 = vpop.f32.mrf.mxu0
    %v810 = vadd.f32 0.0, %v809
    %811 = vmatmul.f32.gmra.mxu0 %v780
    %v812 = vpop.f32.mrf.mxu0
    %v813 = vadd.f32 0.0, %v812
    %814 = vmatmul.f32.gmra.mxu0 %v783
    %v815 = vpop.f32.mrf.mxu0
    %v816 = vadd.f32 0.0, %v815
    %817 = vmatmul.f32.gmra.mxu0 %v786
    %v818 = vpop.f32.mrf.mxu0
    %v819 = vadd.f32 0.0, %v818
    %820 = vdwg.mxu0
    %821 = vmatpush.msra.mxu0 0.0
    %822 = vmatpush.msra.mxu0 0.0
    %823 = vmatpush.msra.mxu0 0.0
    %824 = vmatpush.msra.mxu0 0.0
    %825 = vmatpush.msra.mxu0 0.0
    %826 = vmatpush.msra.mxu0 0.0
    %827 = vmatpush.msra.mxu0 0.0
    %828 = vmatpush.msra.mxu0 0.0
    %829 = vmatpush.msra.mxu0 0.0
    %830 = vmatpush.msra.mxu0 0.0
    %831 = vmatpush.msra.mxu0 0.0
    %832 = vmatpush.msra.mxu0 0.0
    %833 = vmatpush.msra.mxu0 0.0
    %834 = vmatpush.msra.mxu0 0.0
    %835 = vmatpush.msra.mxu0 0.0
    %836 = vmatpush.msra.mxu0 %v790
    %837 = vmatmul.f32.gmra.mxu0 %v777
    %v838 = vpop.f32.mrf.mxu0
    %v839 = vadd.f32 0.0, %v838
    %840 = vmatmul.f32.gmra.mxu0 %v780
    %v841 = vpop.f32.mrf.mxu0
    %v842 = vadd.f32 0.0, %v841
    %843 = vmatmul.f32.gmra.mxu0 %v783
    %v844 = vpop.f32.mrf.mxu0
    %v845 = vadd.f32 0.0, %v844
    %846 = vmatmul.f32.gmra.mxu0 %v786
    %v847 = vpop.f32.mrf.mxu0
    %v848 = vadd.f32 0.0, %v847
    %849 = vdwg.mxu0
    %v850 = vsub.f32 %v611, %v810
    %v851 = vsub.f32 %v639, %v839
    %v852 = vsub.f32 %v613, %v813
    %v853 = vsub.f32 %v641, %v842
    %v854 = vmul.f32 %v850, %v816
    %v855 = vmul.f32 %v851, %v845
    %v856 = vmul.f32 %v852, %v819
    %v857 = vmul.f32 %v853, %v848
    %v859 = vperm.slane %v644, 0
    %v860 = vperm.slane %v644, 1
    %v863 = vmul.f32 %v854, %v859
    %v864 = vmul.f32 %v855, %v860
    %v865 = vmul.f32 %v856, %v859
    %v866 = vmul.f32 %v857, %v860
    %v868 = vperm.slane %v646, 0
    %v869 = vperm.slane %v646, 1
    %v872 = vadd.f32 %v863, %v868
    %v873 = vadd.f32 %v864, %v869
    %v874 = vadd.f32 %v865, %v868
    %v875 = vadd.f32 %v866, %v869
    %v876 = vadd.f32 %v611, %v872
    %v877 = vadd.f32 %v639, %v873
    %v878 = vadd.f32 %v613, %v874
    %v879 = vadd.f32 %v641, %v875
    %vm880 = vcmp.gt.f32.partialorder %v876, 0.0
    %vm881 = vcmp.gt.f32.partialorder %v877, 0.0
    %vm882 = vcmp.gt.f32.partialorder %v878, 0.0
    %vm883 = vcmp.gt.f32.partialorder %v879, 0.0
    %v884 = vmin.f32 %v876, 0.0
    %v885 = vmin.f32 %v877, 0.0
    %v886 = vmin.f32 %v878, 0.0
    %v887 = vmin.f32 %v879, 0.0
    %v888 = vmul.f32 %v884, 1.442695
    %v889 = vpow.pop %v888
    %v890 = vmul.f32 %v885, 1.442695
    %v891 = vpow.pop %v890
    %v892 = vmul.f32 %v886, 1.442695
    %v893 = vpow.pop %v892
    %v894 = vmul.f32 %v887, 1.442695
    %v895 = vpow.pop %v894
    %v896 = vsub.f32 %v889, 1.0
    %v897 = vsub.f32 %v891, 1.0
    %v898 = vsub.f32 %v893, 1.0
    %v899 = vsub.f32 %v895, 1.0
    %v900 = vmul.f32 %v896, 1.6732632
    %v901 = vmul.f32 %v897, 1.6732632
    %v902 = vmul.f32 %v898, 1.6732632
    %v903 = vmul.f32 %v899, 1.6732632
    %v904 = vsel %vm880, %v876, %v900
    %v905 = vsel %vm881, %v877, %v901
    %v906 = vsel %vm882, %v878, %v902
    %v907 = vsel %vm883, %v879, %v903
    %v908 = vmul.f32 %v904, 1.050701
    %v909 = vmul.f32 %v905, 1.050701
    %v910 = vmul.f32 %v906, 1.050701
    %v911 = vmul.f32 %v907, 1.050701
    %v912 = vpack.c.bf16 %v910, %v908
    %v913 = vpack.c.bf16 %v911, %v909
    %s914 = scalar_lea.vmem [#allocation2], 256
    %v915 = vld [vmem:[%s914] sm:$0xff]
    %v916 = vld [vmem:[%s914 + $0x8] sm:$0xff]
    %v917 = vld [vmem:[%s914 + $0x10] sm:$0xff]
    %v918 = vld [vmem:[%s914 + $0x18] sm:$0xff]
    %v919 = vld [vmem:[%s914 + $0x20] sm:$0xff]
    %v920 = vld [vmem:[%s914 + $0x28] sm:$0xff]
    %v921 = vld [vmem:[%s914 + $0x30] sm:$0xff]
    %v922 = vld [vmem:[%s914 + $0x38] sm:$0xff]
    %v923 = vld [vmem:[%s914 + $0x40] sm:$0xff]
    %v924 = vld [vmem:[%s914 + $0x48] sm:$0xff]
    %v925 = vld [vmem:[%s914 + $0x50] sm:$0xff]
    %v926 = vld [vmem:[%s914 + $0x58] sm:$0xff]
    %v927 = vld [vmem:[%s914 + $0x60] sm:$0xff]
    %v928 = vld [vmem:[%s914 + $0x68] sm:$0xff]
    %v929 = vld [vmem:[%s914 + $0x70] sm:$0xff]
    %v930 = vld [vmem:[%s914 + $0x78] sm:$0xff]
    %v931 = vld [vmem:[%s914 + $0x80] sm:$0xff]
    %v932 = vld [vmem:[%s914 + $0x88] sm:$0xff]
    %v933 = vld [vmem:[%s914 + $0x90] sm:$0xff]
    %v934 = vld [vmem:[%s914 + $0x98] sm:$0xff]
    %v935 = vld [vmem:[%s914 + $0xa0] sm:$0xff]
    %v936 = vld [vmem:[%s914 + $0xa8] sm:$0xff]
    %v937 = vld [vmem:[%s914 + $0xb0] sm:$0xff]
    %v938 = vld [vmem:[%s914 + $0xb8] sm:$0xff]
    %v939 = vld [vmem:[%s914 + $0xc0] sm:$0xff]
    %v940 = vld [vmem:[%s914 + $0xc8] sm:$0xff]
    %v941 = vld [vmem:[%s914 + $0xd0] sm:$0xff]
    %v942 = vld [vmem:[%s914 + $0xd8] sm:$0xff]
    %v943 = vld [vmem:[%s914 + $0xe0] sm:$0xff]
    %v944 = vld [vmem:[%s914 + $0xe8] sm:$0xff]
    %v945 = vld [vmem:[%s914 + $0xf0] sm:$0xff]
    %v946 = vld [vmem:[%s914 + $0xf8] sm:$0xff]
    %s947 = scalar_lea.vmem %s3, 4
    %v948 = vld [vmem:[%s947] sm:$0x3]
    %v950 = vperm.slane %v948, 0
    %v951 = vperm.slane %v948, 1
    %v986 = vunpack.c.l.b16 %v915
    %v987 = vunpack.c.h.b16 %v915
    %v988 = vunpack.c.l.b16 %v916
    %v989 = vunpack.c.h.b16 %v916
    %v990 = vunpack.c.l.b16 %v917
    %v991 = vunpack.c.h.b16 %v917
    %v992 = vunpack.c.l.b16 %v918
    %v993 = vunpack.c.h.b16 %v918
    %v994 = vunpack.c.l.b16 %v919
    %v995 = vunpack.c.h.b16 %v919
    %v996 = vunpack.c.l.b16 %v920
    %v997 = vunpack.c.h.b16 %v920
    %v998 = vunpack.c.l.b16 %v921
    %v999 = vunpack.c.h.b16 %v921
    %v1000 = vunpack.c.l.b16 %v922
    %v1001 = vunpack.c.h.b16 %v922
    %v1002 = vunpack.c.l.b16 %v923
    %v1003 = vunpack.c.h.b16 %v923
    %v1004 = vunpack.c.l.b16 %v924
    %v1005 = vunpack.c.h.b16 %v924
    %v1006 = vunpack.c.l.b16 %v925
    %v1007 = vunpack.c.h.b16 %v925
    %v1008 = vunpack.c.l.b16 %v926
    %v1009 = vunpack.c.h.b16 %v926
    %v1010 = vunpack.c.l.b16 %v927
    %v1011 = vunpack.c.h.b16 %v927
    %v1012 = vunpack.c.l.b16 %v928
    %v1013 = vunpack.c.h.b16 %v928
    %v1014 = vunpack.c.l.b16 %v929
    %v1015 = vunpack.c.h.b16 %v929
    %v1016 = vunpack.c.l.b16 %v930
    %v1017 = vunpack.c.h.b16 %v930
    %v1018 = vunpack.c.l.b16 %v931
    %v1019 = vunpack.c.h.b16 %v931
    %v1020 = vunpack.c.l.b16 %v932
    %v1021 = vunpack.c.h.b16 %v932
    %v1022 = vunpack.c.l.b16 %v933
    %v1023 = vunpack.c.h.b16 %v933
    %v1024 = vunpack.c.l.b16 %v934
    %v1025 = vunpack.c.h.b16 %v934
    %v1026 = vunpack.c.l.b16 %v935
    %v1027 = vunpack.c.h.b16 %v935
    %v1028 = vunpack.c.l.b16 %v936
    %v1029 = vunpack.c.h.b16 %v936
    %v1030 = vunpack.c.l.b16 %v937
    %v1031 = vunpack.c.h.b16 %v937
    %v1032 = vunpack.c.l.b16 %v938
    %v1033 = vunpack.c.h.b16 %v938
    %v1034 = vunpack.c.l.b16 %v939
    %v1035 = vunpack.c.h.b16 %v939
    %v1036 = vunpack.c.l.b16 %v940
    %v1037 = vunpack.c.h.b16 %v940
    %v1038 = vunpack.c.l.b16 %v941
    %v1039 = vunpack.c.h.b16 %v941
    %v1040 = vunpack.c.l.b16 %v942
    %v1041 = vunpack.c.h.b16 %v942
    %v1042 = vunpack.c.l.b16 %v943
    %v1043 = vunpack.c.h.b16 %v943
    %v1044 = vunpack.c.l.b16 %v944
    %v1045 = vunpack.c.h.b16 %v944
    %v1046 = vunpack.c.l.b16 %v945
    %v1047 = vunpack.c.h.b16 %v945
    %v1048 = vunpack.c.l.b16 %v946
    %v1049 = vunpack.c.h.b16 %v946
    %v1050 = vpack.c.b16 %v988, %v986
    %v1051 = vpack.c.b16 %v989, %v987
    %v1052 = vpack.c.b16 %v992, %v990
    %v1053 = vpack.c.b16 %v993, %v991
    %v1054 = vpack.c.b16 %v996, %v994
    %v1055 = vpack.c.b16 %v997, %v995
    %v1056 = vpack.c.b16 %v1000, %v998
    %v1057 = vpack.c.b16 %v1001, %v999
    %v1058 = vpack.c.b16 %v1004, %v1002
    %v1059 = vpack.c.b16 %v1005, %v1003
    %v1060 = vpack.c.b16 %v1008, %v1006
    %v1061 = vpack.c.b16 %v1009, %v1007
    %v1062 = vpack.c.b16 %v1012, %v1010
    %v1063 = vpack.c.b16 %v1013, %v1011
    %v1064 = vpack.c.b16 %v1016, %v1014
    %v1065 = vpack.c.b16 %v1017, %v1015
    %v1066 = vpack.c.b16 %v1020, %v1018
    %v1067 = vpack.c.b16 %v1021, %v1019
    %v1068 = vpack.c.b16 %v1024, %v1022
    %v1069 = vpack.c.b16 %v1025, %v1023
    %v1070 = vpack.c.b16 %v1028, %v1026
    %v1071 = vpack.c.b16 %v1029, %v1027
    %v1072 = vpack.c.b16 %v1032, %v1030
    %v1073 = vpack.c.b16 %v1033, %v1031
    %v1074 = vpack.c.b16 %v1036, %v1034
    %v1075 = vpack.c.b16 %v1037, %v1035
    %v1076 = vpack.c.b16 %v1040, %v1038
    %v1077 = vpack.c.b16 %v1041, %v1039
    %v1078 = vpack.c.b16 %v1044, %v1042
    %v1079 = vpack.c.b16 %v1045, %v1043
    %v1080 = vpack.c.b16 %v1048, %v1046
    %v1081 = vpack.c.b16 %v1049, %v1047
    %1114 = vmatpush.bf16.msra.mxu0 %v1064
    %1115 = vmatpush.bf16.msra.mxu0 %v1062
    %1116 = vmatpush.bf16.msra.mxu0 %v1060
    %1117 = vmatpush.bf16.msra.mxu0 %v1058
    %1118 = vmatpush.bf16.msra.mxu0 %v1056
    %1119 = vmatpush.bf16.msra.mxu0 %v1054
    %1120 = vmatpush.bf16.msra.mxu0 %v1052
    %1121 = vmatpush.bf16.msra.mxu0 %v1050
    %1122 = vmatmul.bf16.gmra.mxu0 %v912
    %v1123 = vpop.f32.mrf.mxu0
    %v1124 = vadd.f32 %v950, %v1123
    %v1125 = vpop.f32.mrf.mxu0
    %v1126 = vadd.f32 %v950, %v1125
    %1127 = vdwg.mxu0
    %1128 = vmatpush.bf16.msra.mxu0 %v1080
    %1129 = vmatpush.bf16.msra.mxu0 %v1078
    %1130 = vmatpush.bf16.msra.mxu0 %v1076
    %1131 = vmatpush.bf16.msra.mxu0 %v1074
    %1132 = vmatpush.bf16.msra.mxu0 %v1072
    %1133 = vmatpush.bf16.msra.mxu0 %v1070
    %1134 = vmatpush.bf16.msra.mxu0 %v1068
    %1135 = vmatpush.bf16.msra.mxu0 %v1066
    %1136 = vmatmul.bf16.gmra.mxu0 %v913
    %v1137 = vpop.f32.mrf.mxu0
    %v1138 = vadd.f32 %v1124, %v1137
    %v1139 = vpop.f32.mrf.mxu0
    %v1140 = vadd.f32 %v1126, %v1139
    %1141 = vdwg.mxu0
    %1142 = vmatpush.bf16.msra.mxu0 %v1065
    %1143 = vmatpush.bf16.msra.mxu0 %v1063
    %1144 = vmatpush.bf16.msra.mxu0 %v1061
    %1145 = vmatpush.bf16.msra.mxu0 %v1059
    %1146 = vmatpush.bf16.msra.mxu0 %v1057
    %1147 = vmatpush.bf16.msra.mxu0 %v1055
    %1148 = vmatpush.bf16.msra.mxu0 %v1053
    %1149 = vmatpush.bf16.msra.mxu0 %v1051
    %1150 = vmatmul.bf16.gmra.mxu0 %v912
    %v1151 = vpop.f32.mrf.mxu0
    %v1152 = vadd.f32 %v951, %v1151
    %v1153 = vpop.f32.mrf.mxu0
    %v1154 = vadd.f32 %v951, %v1153
    %1155 = vdwg.mxu0
    %1156 = vmatpush.bf16.msra.mxu0 %v1081
    %1157 = vmatpush.bf16.msra.mxu0 %v1079
    %1158 = vmatpush.bf16.msra.mxu0 %v1077
    %1159 = vmatpush.bf16.msra.mxu0 %v1075
    %1160 = vmatpush.bf16.msra.mxu0 %v1073
    %1161 = vmatpush.bf16.msra.mxu0 %v1071
    %1162 = vmatpush.bf16.msra.mxu0 %v1069
    %1163 = vmatpush.bf16.msra.mxu0 %v1067
    %1164 = vmatmul.bf16.gmra.mxu0 %v913
    %v1165 = vpop.f32.mrf.mxu0
    %v1166 = vadd.f32 %v1152, %v1165
    %v1167 = vpop.f32.mrf.mxu0
    %v1168 = vadd.f32 %v1154, %v1167
    %1169 = vdwg.mxu0
    %s1170 = scalar_lea.vmem %s4, 4
    %v1171 = vld [vmem:[%s1170] sm:$0x3]
    %s1172 = scalar_lea.vmem %s5, 4
    %v1173 = vld [vmem:[%s1172] sm:$0x3]
    %v1174 = vmul.f32 %v1138, %v1138
    %v1175 = vmul.f32 %v1166, %v1166
    %v1176 = vmul.f32 %v1140, %v1140
    %v1177 = vmul.f32 %v1168, %v1168
    %1178 = vmatpush.msra.mxu0 %v66
    %1179 = vmatpush.msra.mxu0 %v65
    %1180 = vmatpush.msra.mxu0 %v64
    %1181 = vmatpush.msra.mxu0 %v63
    %1182 = vmatpush.msra.mxu0 %v62
    %1183 = vmatpush.msra.mxu0 %v61
    %1184 = vmatpush.msra.mxu0 %v60
    %1185 = vmatpush.msra.mxu0 %v59
    %1186 = vmatpush.msra.mxu0 %v58
    %1187 = vmatpush.msra.mxu0 %v57
    %1188 = vmatpush.msra.mxu0 %v56
    %1189 = vmatpush.msra.mxu0 %v55
    %1190 = vmatpush.msra.mxu0 %v54
    %1191 = vmatpush.msra.mxu0 %v53
    %1192 = vmatpush.msra.mxu0 %v52
    %1193 = vmatpush.msra.mxu0 %v51
    %1194 = vmatmul.f32.gmra.mxu0 %v1138
    %v1195 = vpop.f32.mrf.mxu0
    %v1196 = vadd.f32 0.0, %v1195
    %1197 = vmatmul.f32.gmra.mxu0 %v1140
    %v1198 = vpop.f32.mrf.mxu0
    %v1199 = vadd.f32 0.0, %v1198
    %1200 = vmatmul.f32.gmra.mxu0 %v1174
    %v1201 = vpop.f32.mrf.mxu0
    %v1202 = vadd.f32 0.0, %v1201
    %1203 = vmatmul.f32.gmra.mxu0 %v1176
    %v1204 = vpop.f32.mrf.mxu0
    %v1205 = vadd.f32 0.0, %v1204
    %1206 = vdwg.mxu0
    %1207 = vmatpush.msra.mxu0 %v82
    %1208 = vmatpush.msra.mxu0 %v81
    %1209 = vmatpush.msra.mxu0 %v80
    %1210 = vmatpush.msra.mxu0 %v79
    %1211 = vmatpush.msra.mxu0 %v78
    %1212 = vmatpush.msra.mxu0 %v77
    %1213 = vmatpush.msra.mxu0 %v76
    %1214 = vmatpush.msra.mxu0 %v75
    %1215 = vmatpush.msra.mxu0 %v74
    %1216 = vmatpush.msra.mxu0 %v73
    %1217 = vmatpush.msra.mxu0 %v72
    %1218 = vmatpush.msra.mxu0 %v71
    %1219 = vmatpush.msra.mxu0 %v70
    %1220 = vmatpush.msra.mxu0 %v69
    %1221 = vmatpush.msra.mxu0 %v68
    %1222 = vmatpush.msra.mxu0 %v67
    %1223 = vmatmul.f32.gmra.mxu0 %v1166
    %v1224 = vpop.f32.mrf.mxu0
    %v1225 = vadd.f32 %v1196, %v1224
    %1226 = vmatmul.f32.gmra.mxu0 %v1168
    %v1227 = vpop.f32.mrf.mxu0
    %v1228 = vadd.f32 %v1199, %v1227
    %1229 = vmatmul.f32.gmra.mxu0 %v1175
    %v1230 = vpop.f32.mrf.mxu0
    %v1231 = vadd.f32 %v1202, %v1230
    %1232 = vmatmul.f32.gmra.mxu0 %v1177
    %v1233 = vpop.f32.mrf.mxu0
    %v1234 = vadd.f32 %v1205, %v1233
    %1235 = vdwg.mxu0
    %v1236 = vmul.f32 %v1225, 0.015625
    %v1237 = vmul.f32 %v1228, 0.015625
    %v1238 = vmul.f32 %v1225, %v1236
    %v1239 = vmul.f32 %v1228, %v1237
    %v1240 = vsub.f32 %v1231, %v1238
    %v1241 = vsub.f32 %v1234, %v1239
    %v1242 = vmax.f32 %v1240, 0.0
    %v1243 = vmax.f32 %v1241, 0.0
    %v1244 = vmul.f32 %v1242, 0.015873017
    %v1245 = vmul.f32 %v1243, 0.015873017
    %v1246 = vrsqrt.pop %v1244
    %v1247 = vmul.f32 %v1246, %v1244
    %v1248 = vmul.f32 %v1247, %v1246
    %v1249 = vmul.f32 0.5, %v1248
    %v1250 = vsub.f32 1.5, %v1249
    %v1251 = vmul.f32 %v1246, %v1250
    %v1252 = vmul.f32 %v1244, %v1251
    %vm1253 = vcmp.eq.f32.partialorder %v1244, inf
    %v1254 = vsel %vm1253, %v1244, %v1252
    %vm1255 = vcmp.eq.f32.partialorder %v1244, 0.0
    %v1256 = vand.u32 %v1244, 2147483648
    %v1257 = vsel %vm1255, %v1256, %v1254
    %v1258 = vrsqrt.pop %v1245
    %v1259 = vmul.f32 %v1258, %v1245
    %v1260 = vmul.f32 %v1259, %v1258
    %v1261 = vmul.f32 0.5, %v1260
    %v1262 = vsub.f32 1.5, %v1261
    %v1263 = vmul.f32 %v1258, %v1262
    %v1264 = vmul.f32 %v1245, %v1263
    %vm1265 = vcmp.eq.f32.partialorder %v1245, inf
    %v1266 = vsel %vm1265, %v1245, %v1264
    %vm1267 = vcmp.eq.f32.partialorder %v1245, 0.0
    %v1268 = vand.u32 %v1245, 2147483648
    %v1269 = vsel %vm1267, %v1268, %v1266
    %v1270 = vadd.f32 %v1257, 1e-06
    %v1271 = vadd.f32 %v1269, 1e-06
    %v1272 = vrcp.pop %v1270
    %v1273 = vmul.f32 %v1270, %v1272
    %v1274 = vsub.f32 1.0, %v1273
    %v1275 = vmul.f32 %v1272, %v1274
    %v1276 = vadd.f32 %v1272, %v1275
    %vm1277 = vweird.f32 %v1270
    %vm1278 = vweird.f32 %v1272
    %vm1279 = vmor %vm1277, %vm1278
    %v1280 = vsel %vm1279, %v1272, %v1276
    %v1281 = vand.u32 2147483647, %v1270
    %vm1282 = vcmp.eq.f32.partialorder %v1281, 8.507059e+37
    %v1283 = vand.u32 %v1270, 2147483648
    %v1284 = vor.u32 1.1754944e-38, %v1283
    %v1285 = vsel %vm1282, %v1284, %v1280
    %v1286 = vrcp.pop %v1271
    %v1287 = vmul.f32 %v1271, %v1286
    %v1288 = vsub.f32 1.0, %v1287
    %v1289 = vmul.f32 %v1286, %v1288
    %v1290 = vadd.f32 %v1286, %v1289
    %vm1291 = vweird.f32 %v1271
    %vm1292 = vweird.f32 %v1286
    %vm1293 = vmor %vm1291, %vm1292
    %v1294 = vsel %vm1293, %v1286, %v1290
    %v1295 = vand.u32 2147483647, %v1271
    %vm1296 = vcmp.eq.f32.partialorder %v1295, 8.507059e+37
    %v1297 = vand.u32 %v1271, 2147483648
    %v1298 = vor.u32 1.1754944e-38, %v1297
    %v1299 = vsel %vm1296, %v1298, %v1294
    %1300 = vst [vmem:[#allocation1] ss:$2 sm:$0xff] %v83
    %v1301 = vld.sshfl [vmem:[#allocation1] sm:$0xff pattern:$0x75316420]
    %v1302 = vld.sshfl [vmem:[#allocation1 + $0x8] sm:$0xff pattern:$0x75316420]
    %v1304 = vsel %vm248, %v1236, 0
    %v1307 = vsel %vm248, %v1237, 0
    %v1310 = vsel %vm248, %v1285, 0
    %v1313 = vsel %vm248, %v1299, 0
    %v1315 = vsel %vm261, %v1301, 0
    %v1317 = vsel %vm261, %v1302, 0
    %1319 = vmatpush.msra.mxu0 0.0
    %1320 = vmatpush.msra.mxu0 0.0
    %1321 = vmatpush.msra.mxu0 0.0
    %1322 = vmatpush.msra.mxu0 0.0
    %1323 = vmatpush.msra.mxu0 0.0
    %1324 = vmatpush.msra.mxu0 0.0
    %1325 = vmatpush.msra.mxu0 0.0
    %1326 = vmatpush.msra.mxu0 0.0
    %1327 = vmatpush.msra.mxu0 0.0
    %1328 = vmatpush.msra.mxu0 0.0
    %1329 = vmatpush.msra.mxu0 0.0
    %1330 = vmatpush.msra.mxu0 0.0
    %1331 = vmatpush.msra.mxu0 0.0
    %1332 = vmatpush.msra.mxu0 0.0
    %1333 = vmatpush.msra.mxu0 0.0
    %1334 = vmatpush.msra.mxu0 %v1315
    %1335 = vmatmul.f32.gmra.mxu0 %v1304
    %v1336 = vpop.f32.mrf.mxu0
    %v1337 = vadd.f32 0.0, %v1336
    %1338 = vmatmul.f32.gmra.mxu0 %v1307
    %v1339 = vpop.f32.mrf.mxu0
    %v1340 = vadd.f32 0.0, %v1339
    %1341 = vmatmul.f32.gmra.mxu0 %v1310
    %v1342 = vpop.f32.mrf.mxu0
    %v1343 = vadd.f32 0.0, %v1342
    %1344 = vmatmul.f32.gmra.mxu0 %v1313
    %v1345 = vpop.f32.mrf.mxu0
    %v1346 = vadd.f32 0.0, %v1345
    %1347 = vdwg.mxu0
    %1348 = vmatpush.msra.mxu0 0.0
    %1349 = vmatpush.msra.mxu0 0.0
    %1350 = vmatpush.msra.mxu0 0.0
    %1351 = vmatpush.msra.mxu0 0.0
    %1352 = vmatpush.msra.mxu0 0.0
    %1353 = vmatpush.msra.mxu0 0.0
    %1354 = vmatpush.msra.mxu0 0.0
    %1355 = vmatpush.msra.mxu0 0.0
    %1356 = vmatpush.msra.mxu0 0.0
    %1357 = vmatpush.msra.mxu0 0.0
    %1358 = vmatpush.msra.mxu0 0.0
    %1359 = vmatpush.msra.mxu0 0.0
    %1360 = vmatpush.msra.mxu0 0.0
    %1361 = vmatpush.msra.mxu0 0.0
    %1362 = vmatpush.msra.mxu0 0.0
    %1363 = vmatpush.msra.mxu0 %v1317
    %1364 = vmatmul.f32.gmra.mxu0 %v1304
    %v1365 = vpop.f32.mrf.mxu0
    %v1366 = vadd.f32 0.0, %v1365
    %1367 = vmatmul.f32.gmra.mxu0 %v1307
    %v1368 = vpop.f32.mrf.mxu0
    %v1369 = vadd.f32 0.0, %v1368
    %1370 = vmatmul.f32.gmra.mxu0 %v1310
    %v1371 = vpop.f32.mrf.mxu0
    %v1372 = vadd.f32 0.0, %v1371
    %1373 = vmatmul.f32.gmra.mxu0 %v1313
    %v1374 = vpop.f32.mrf.mxu0
    %v1375 = vadd.f32 0.0, %v1374
    %1376 = vdwg.mxu0
    %v1377 = vsub.f32 %v1138, %v1337
    %v1378 = vsub.f32 %v1166, %v1366
    %v1379 = vsub.f32 %v1140, %v1340
    %v1380 = vsub.f32 %v1168, %v1369
    %v1381 = vmul.f32 %v1377, %v1343
    %v1382 = vmul.f32 %v1378, %v1372
    %v1383 = vmul.f32 %v1379, %v1346
    %v1384 = vmul.f32 %v1380, %v1375
    %v1386 = vperm.slane %v1171, 0
    %v1387 = vperm.slane %v1171, 1
    %v1390 = vmul.f32 %v1381, %v1386
    %v1391 = vmul.f32 %v1382, %v1387
    %v1392 = vmul.f32 %v1383, %v1386
    %v1393 = vmul.f32 %v1384, %v1387
    %v1395 = vperm.slane %v1173, 0
    %v1396 = vperm.slane %v1173, 1
    %v1399 = vadd.f32 %v1390, %v1395
    %v1400 = vadd.f32 %v1391, %v1396
    %v1401 = vadd.f32 %v1392, %v1395
    %v1402 = vadd.f32 %v1393, %v1396
    %v1403 = vadd.f32 %v1138, %v1399
    %v1404 = vadd.f32 %v1166, %v1400
    %v1405 = vadd.f32 %v1140, %v1401
    %v1406 = vadd.f32 %v1168, %v1402
    %vm1407 = vcmp.gt.f32.partialorder %v1403, 0.0
    %vm1408 = vcmp.gt.f32.partialorder %v1404, 0.0
    %vm1409 = vcmp.gt.f32.partialorder %v1405, 0.0
    %vm1410 = vcmp.gt.f32.partialorder %v1406, 0.0
    %v1411 = vmin.f32 %v1403, 0.0
    %v1412 = vmin.f32 %v1404, 0.0
    %v1413 = vmin.f32 %v1405, 0.0
    %v1414 = vmin.f32 %v1406, 0.0
    %v1415 = vmul.f32 %v1411, 1.442695
    %v1416 = vpow.pop %v1415
    %v1417 = vmul.f32 %v1412, 1.442695
    %v1418 = vpow.pop %v1417
    %v1419 = vmul.f32 %v1413, 1.442695
    %v1420 = vpow.pop %v1419
    %v1421 = vmul.f32 %v1414, 1.442695
    %v1422 = vpow.pop %v1421
    %v1423 = vsub.f32 %v1416, 1.0
    %v1424 = vsub.f32 %v1418, 1.0
    %v1425 = vsub.f32 %v1420, 1.0
    %v1426 = vsub.f32 %v1422, 1.0
    %v1427 = vmul.f32 %v1423, 1.6732632
    %v1428 = vmul.f32 %v1424, 1.6732632
    %v1429 = vmul.f32 %v1425, 1.6732632
    %v1430 = vmul.f32 %v1426, 1.6732632
    %v1431 = vsel %vm1407, %v1403, %v1427
    %v1432 = vsel %vm1408, %v1404, %v1428
    %v1433 = vsel %vm1409, %v1405, %v1429
    %v1434 = vsel %vm1410, %v1406, %v1430
    %v1435 = vmul.f32 %v1431, 1.050701
    %v1436 = vmul.f32 %v1432, 1.050701
    %v1437 = vmul.f32 %v1433, 1.050701
    %v1438 = vmul.f32 %v1434, 1.050701
    %v1439 = vpack.c.bf16 %v1437, %v1435
    %v1440 = vpack.c.bf16 %v1438, %v1436
    %v1441 = vld [vmem:[%s6] sm:$0xf]
    %v1442 = vld [vmem:[%s6 + $0x4] sm:$0xf]
    %v1443 = vld [vmem:[%s6 + $0x8] sm:$0xf]
    %v1444 = vld [vmem:[%s6 + $0xc] sm:$0xf]
    %v1445 = vld [vmem:[%s6 + $0x10] sm:$0xf]
    %v1446 = vld [vmem:[%s6 + $0x14] sm:$0xf]
    %v1447 = vld [vmem:[%s6 + $0x18] sm:$0xf]
    %v1448 = vld [vmem:[%s6 + $0x1c] sm:$0xf]
    %v1449 = vld [vmem:[%s6 + $0x20] sm:$0xf]
    %v1450 = vld [vmem:[%s6 + $0x24] sm:$0xf]
    %v1451 = vld [vmem:[%s6 + $0x28] sm:$0xf]
    %v1452 = vld [vmem:[%s6 + $0x2c] sm:$0xf]
    %v1453 = vld [vmem:[%s6 + $0x30] sm:$0xf]
    %v1454 = vld [vmem:[%s6 + $0x34] sm:$0xf]
    %v1455 = vld [vmem:[%s6 + $0x38] sm:$0xf]
    %v1456 = vld [vmem:[%s6 + $0x3c] sm:$0xf]
    %v1457 = vld [vmem:[%s6 + $0x40] sm:$0xf]
    %v1458 = vld [vmem:[%s6 + $0x44] sm:$0xf]
    %v1459 = vld [vmem:[%s6 + $0x48] sm:$0xf]
    %v1460 = vld [vmem:[%s6 + $0x4c] sm:$0xf]
    %v1461 = vld [vmem:[%s6 + $0x50] sm:$0xf]
    %v1462 = vld [vmem:[%s6 + $0x54] sm:$0xf]
    %v1463 = vld [vmem:[%s6 + $0x58] sm:$0xf]
    %v1464 = vld [vmem:[%s6 + $0x5c] sm:$0xf]
    %v1465 = vld [vmem:[%s6 + $0x60] sm:$0xf]
    %v1466 = vld [vmem:[%s6 + $0x64] sm:$0xf]
    %v1467 = vld [vmem:[%s6 + $0x68] sm:$0xf]
    %v1468 = vld [vmem:[%s6 + $0x6c] sm:$0xf]
    %v1469 = vld [vmem:[%s6 + $0x70] sm:$0xf]
    %v1470 = vld [vmem:[%s6 + $0x74] sm:$0xf]
    %v1471 = vld [vmem:[%s6 + $0x78] sm:$0xf]
    %v1472 = vld [vmem:[%s6 + $0x7c] sm:$0xf]
    %v1473 = vld [vmem:[%s7] sm:$0x1]
    %v1475 = vperm.slane %v1473, 0
    %v1509 = vunpack.c.l.b16 %v1441
    %v1510 = vunpack.c.l.b16 %v1442
    %v1511 = vunpack.c.l.b16 %v1443
    %v1512 = vunpack.c.l.b16 %v1444
    %v1513 = vunpack.c.l.b16 %v1445
    %v1514 = vunpack.c.l.b16 %v1446
    %v1515 = vunpack.c.l.b16 %v1447
    %v1516 = vunpack.c.l.b16 %v1448
    %v1517 = vunpack.c.l.b16 %v1449
    %v1518 = vunpack.c.l.b16 %v1450
    %v1519 = vunpack.c.l.b16 %v1451
    %v1520 = vunpack.c.l.b16 %v1452
    %v1521 = vunpack.c.l.b16 %v1453
    %v1522 = vunpack.c.l.b16 %v1454
    %v1523 = vunpack.c.l.b16 %v1455
    %v1524 = vunpack.c.l.b16 %v1456
    %v1525 = vunpack.c.l.b16 %v1457
    %v1526 = vunpack.c.l.b16 %v1458
    %v1527 = vunpack.c.l.b16 %v1459
    %v1528 = vunpack.c.l.b16 %v1460
    %v1529 = vunpack.c.l.b16 %v1461
    %v1530 = vunpack.c.l.b16 %v1462
    %v1531 = vunpack.c.l.b16 %v1463
    %v1532 = vunpack.c.l.b16 %v1464
    %v1533 = vunpack.c.l.b16 %v1465
    %v1534 = vunpack.c.l.b16 %v1466
    %v1535 = vunpack.c.l.b16 %v1467
    %v1536 = vunpack.c.l.b16 %v1468
    %v1537 = vunpack.c.l.b16 %v1469
    %v1538 = vunpack.c.l.b16 %v1470
    %v1539 = vunpack.c.l.b16 %v1471
    %v1540 = vunpack.c.l.b16 %v1472
    %v1541 = vpack.c.b16 %v1510, %v1509
    %v1542 = vpack.c.b16 %v1512, %v1511
    %v1543 = vpack.c.b16 %v1514, %v1513
    %v1544 = vpack.c.b16 %v1516, %v1515
    %v1545 = vpack.c.b16 %v1518, %v1517
    %v1546 = vpack.c.b16 %v1520, %v1519
    %v1547 = vpack.c.b16 %v1522, %v1521
    %v1548 = vpack.c.b16 %v1524, %v1523
    %v1549 = vpack.c.b16 %v1526, %v1525
    %v1550 = vpack.c.b16 %v1528, %v1527
    %v1551 = vpack.c.b16 %v1530, %v1529
    %v1552 = vpack.c.b16 %v1532, %v1531
    %v1553 = vpack.c.b16 %v1534, %v1533
    %v1554 = vpack.c.b16 %v1536, %v1535
    %v1555 = vpack.c.b16 %v1538, %v1537
    %v1556 = vpack.c.b16 %v1540, %v1539
    %1573 = vmatpush.bf16.msra.mxu0 %v1548
    %1574 = vmatpush.bf16.msra.mxu0 %v1547
    %1575 = vmatpush.bf16.msra.mxu0 %v1546
    %1576 = vmatpush.bf16.msra.mxu0 %v1545
    %1577 = vmatpush.bf16.msra.mxu0 %v1544
    %1578 = vmatpush.bf16.msra.mxu0 %v1543
    %1579 = vmatpush.bf16.msra.mxu0 %v1542
    %1580 = vmatpush.bf16.msra.mxu0 %v1541
    %1581 = vmatmul.bf16.gmra.mxu0 %v1439
    %v1582 = vpop.f32.mrf.mxu0
    %v1583 = vadd.f32 %v1475, %v1582
    %v1584 = vpop.f32.mrf.mxu0
    %v1585 = vadd.f32 %v1475, %v1584
    %1586 = vdwg.mxu0
    %1587 = vmatpush.bf16.msra.mxu0 %v1556
    %1588 = vmatpush.bf16.msra.mxu0 %v1555
    %1589 = vmatpush.bf16.msra.mxu0 %v1554
    %1590 = vmatpush.bf16.msra.mxu0 %v1553
    %1591 = vmatpush.bf16.msra.mxu0 %v1552
    %1592 = vmatpush.bf16.msra.mxu0 %v1551
    %1593 = vmatpush.bf16.msra.mxu0 %v1550
    %1594 = vmatpush.bf16.msra.mxu0 %v1549
    %1595 = vmatmul.bf16.gmra.mxu0 %v1440
    %v1596 = vpop.f32.mrf.mxu0
    %v1597 = vadd.f32 %v1583, %v1596
    %v1598 = vpop.f32.mrf.mxu0
    %v1599 = vadd.f32 %v1585, %v1598
    %1600 = vdwg.mxu0
    %1601 = vst.msk [vmem:[%s10] sm:$0xff] %vm248, %v1597
    %1602 = vst.msk [vmem:[%s10 + $0x8] sm:$0xff] %vm248, %v1599
    // Predicated region
    $region46: #{tpu_custom_call.1} parent=1 // pred_check
      _
    $region47: #{tpu_custom_call.1} parent=1 // pred_check_branch
      %1604 = sbr.rel (0) target = $region49
    $region48: #{tpu_custom_call.1} parent=1 // pred_region
      _
    $region49: #{tpu_custom_call.1} parent=1 // pred_fallthru
      _
    // Predicated region
    $region50: #{tpu_custom_call.1} parent=1 // pred_check
      _
    $region51: #{tpu_custom_call.1} parent=1 // pred_check_branch
      %1606 = sbr.rel (0) target = $region53
    $region52: #{tpu_custom_call.1} parent=1 // pred_region
      _
    $region53: #{tpu_custom_call.1} parent=1 // pred_fallthru
      _
    %1607 = vsyncpa [#allocation3], 1

</llo_original>
